<compile_context>
chip_gen: v7x
topology: tpu7x:2x2x1
jax: 0.10.0
libtpu: 0.0.40
codegen_flags: <defaults>
</compile_context>

<pallas_src>
import functools
import numpy as np
import jax
import jax.numpy as jnp
from jax import lax
from jax.experimental import pallas as pl
from jax.experimental.pallas import tpu as pltpu

KSIZE = 32     # ConvTranspose3d kernel_size (hard-coded in SMiMDecoder)
STRIDE = 16    # ConvTranspose3d stride
PADDING = 8    # ConvTranspose3d padding
PH = STRIDE    # sub-pixel phases per spatial dim (kernel_size = 2 * stride, padding = stride / 2)
V_PHASES = PH ** 3   # 4096 sub-pixel output phases
BN_EPS = 1e-5


def _decoder_kernel(p_ref, w_ref, t_ref, wp_ref, bp_ref, o_ref, *, c_out, v_tile):
    """Fused deconv (per-channel bf16 MXU dot) + (bias+BN shift) + ReLU6 + 1x1x1 proj conv.

    Accumulate-then-store: the output block is written exactly once (bf16); per-channel scalars
    (t, wp) are read once from SMEM and the proj bias is folded into the final store expression.
    """
    p = p_ref[...]                                           # (rt, Kp) bf16, loaded once
    acc = None
    for co in range(c_out):                                  # Co is tiny (e.g. 4) -> static unroll
        y = jnp.dot(p, w_ref[:, pl.ds(co * v_tile, v_tile)],
                    preferred_element_type=jnp.float32)      # (rt, v_tile) f32
        z = wp_ref[co] * jnp.clip(y + t_ref[co], 0.0, 6.0)   # BN shift + ReLU6 + proj weight
        acc = z if acc is None else acc + z
    o_ref[...] = (acc + bp_ref[0]).astype(o_ref.dtype)       # single bf16 store


def prepare_decoder_params(w_dec, b_dec, bn_gamma, bn_beta, bn_mean, bn_var,
                           w_proj, b_proj, *, v_tile=512):
    """One-time parameter packing, hoisted out of the forward pass (do NOT redo per call)."""
    Ci, Co = w_dec.shape[0], w_dec.shape[1]
    assert w_dec.shape == (Ci, Co, KSIZE, KSIZE, KSIZE)
    assert V_PHASES % v_tile == 0 and v_tile % 128 == 0
    nT = V_PHASES // v_tile
    Kdim = Ci * 8
    Kp = ((Kdim + 127) // 128) * 128          # lane-align the contraction dimension (no more)

    # Fold deconv bias + BatchNorm(eval) into a per-channel affine; fold the BN scale into weights.
    # TODO(synk): training-mode SyncBatchNorm batch statistics / running-stat updates are not reproduced.
    s = (bn_gamma / jnp.sqrt(bn_var + BN_EPS)).astype(jnp.float32)
    t = ((b_dec - bn_mean) * s + bn_beta).astype(jnp.float32)
    wp = w_proj.reshape(Co).astype(jnp.float32)
    bp = b_proj.reshape(1).astype(jnp.float32)

    # (Ci, Co, 32,32,32) -> sub-pixel form (K, Co, V) with K=(ci, ad, ah, aw), V=(pd, ph, pw).
    Ws = w_dec.reshape(Ci, Co, 2, PH, 2, PH, 2, PH)
    Wr = Ws[:, :, ::-1, :, ::-1, :, ::-1, :]                         # flip the stride-block axes
    Wk = Wr.transpose(0, 2, 4, 6, 1, 3, 5, 7).reshape(Kdim, Co, V_PHASES).astype(jnp.float32)
    Wk = Wk * s[None, :, None]                                       # BN scale folded into weights
    # Column layout per grid tile: (tile, co, v_within) so each weight block is (Kp, Co*v_tile).
    Wp = Wk.reshape(Kdim, Co, nT, v_tile).transpose(0, 2, 1, 3).reshape(Kdim, nT * Co * v_tile)
    Wp = jnp.pad(Wp, ((0, Kp - Kdim), (0, 0))).astype(jnp.bfloat16)  # bf16: halves weight HBM traffic
    # v_tile is returned so packing and forward cannot silently disagree on the column order.
    return Wp, t, wp, bp, v_tile


@functools.partial(jax.jit, static_argnames=("v_tile", "r_tile"))
def smim_decoder_forward(x, w_pack, t, wp, bp, *, v_tile, r_tile=512):
    N, Ci, D, H, W = x.shape
    Co = t.shape[0]
    assert V_PHASES % v_tile == 0
    nT = V_PHASES // v_tile
    Kdim = Ci * 8
    Kp = w_pack.shape[0]
    assert w_pack.shape == (Kp, nT * Co * v_tile), \
        "packed weights do not match (Co, v_tile): pack and call with the same v_tile"
    Du, Hu, Wu = D + 1, H + 1, W + 1

    # --- glue: im2col of 2x2x2 neighborhoods of the zero-padded input (bf16 matmul operand) ---
    xp = jnp.pad(x, ((0, 0), (0, 0), (1, 1), (1, 1), (1, 1)))
    parts = [xp[:, :, ad:ad + Du, ah:ah + Hu, aw:aw + Wu]
             for ad in (0, 1) for ah in (0, 1) for aw in (0, 1)]
    Pt = jnp.stack(parts, axis=-1).reshape(N, Ci, Du, Hu, Wu, 2, 2, 2)
    Pm = Pt.transpose(0, 2, 3, 4, 1, 5, 6, 7).reshape(N * Du * Hu * Wu, Kdim)
    R = Pm.shape[0]

    # Row tile: multiple of 16 (bf16 sublane packing); prefer >= 2 row tiles so the megacore
    # "parallel" split (v7x has 2 TensorCores) always has work for both cores.
    r_tile = max(16, (r_tile // 16) * 16)
    R16 = ((R + 15) // 16) * 16
    if R16 <= r_tile:
        rt = ((R16 // 2 + 15) // 16) * 16 if R16 >= 32 else R16
    else:
        rt = r_tile
    Rp = ((R + rt - 1) // rt) * rt
    Pm = jnp.pad(Pm, ((0, Rp - R), (0, Kp - Kdim))).astype(jnp.bfloat16)

    # Column tiles are the OUTER grid axis so the (larger) weight block stays resident across the
    # inner row loop and is not re-DMA'd; both axes are independent -> "parallel" for megacore.
    # Per-step VMEM (rt=512, v_tile=512, Co=4): ~0.25 MiB patches + ~1 MiB weights + ~1 MiB out
    # (all double-buffered bf16) + ~2-3 MiB compiler temps for the f32 accumulator -> ~5 MiB,
    # well under every chip's default scoped-VMEM limit (v5e 16 MiB / v6e 32 MiB / v7x 32 MiB),
    # so no explicit vmem_limit_bytes is needed.  r_tile can be raised to 1024-2048 on v6e.
    grid = (nT, Rp // rt)
    out_flat = pl.pallas_call(
        functools.partial(_decoder_kernel, c_out=Co, v_tile=v_tile),
        out_shape=jax.ShapeDtypeStruct((Rp, V_PHASES), jnp.bfloat16),   # bf16 halves HBM writeback
        grid_spec=pltpu.PrefetchScalarGridSpec(
            num_scalar_prefetch=0,
            grid=grid,
            in_specs=[
                pl.BlockSpec((rt, Kp), lambda j, i: (i, 0)),              # bf16 patches
                pl.BlockSpec((Kp, Co * v_tile), lambda j, i: (0, j)),     # packed bf16 weights
                pl.BlockSpec(memory_space=pltpu.MemorySpace.SMEM),        # t  (Co,)
                pl.BlockSpec(memory_space=pltpu.MemorySpace.SMEM),        # wp (Co,)
                pl.BlockSpec(memory_space=pltpu.MemorySpace.SMEM),        # bp (1,)
            ],
            out_specs=pl.BlockSpec((rt, v_tile), lambda j, i: (i, j)),
        ),
        compiler_params=pltpu.CompilerParams(
            dimension_semantics=("parallel", "parallel")),
    )(Pm, w_pack, t, wp, bp)

    # --- glue: interleave phases back to NCDHW and crop the transposed-conv padding (in bf16) ---
    # TODO(synk): at production sizes fold this phase interleave + crop into a lane-dense Pallas
    # epilogue (or the output index_map) so the XLA transpose of the 16^3-upsampled tensor
    # disappears; with bf16 out_flat it already costs half of the previous f32 version.
    Y = out_flat[:R].reshape(N, Du, Hu, Wu, PH, PH, PH)
    Y = Y.transpose(0, 1, 4, 2, 5, 3, 6).reshape(N, PH * Du, PH * Hu, PH * Wu)
    out = Y[:, PADDING:PADDING + STRIDE * D,
               PADDING:PADDING + STRIDE * H,
               PADDING:PADDING + STRIDE * W].astype(jnp.float32)
    return out[:, None]   # (N, 1, 16D, 16H, 16W) float32


def reference_forward(x, w_dec, b_dec, bn_gamma, bn_beta, bn_mean, bn_var, w_proj, b_proj):
    """Pure-JAX f32 reference for SMiMDecoder.forward (BN in eval mode)."""
    rhs = jnp.flip(w_dec, axis=(2, 3, 4)).transpose(1, 0, 2, 3, 4)   # (Co, Ci, 32, 32, 32)
    y = lax.conv_general_dilated(
        x, rhs,
        window_strides=(1, 1, 1),
        padding=[(KSIZE - 1 - PADDING,) * 2] * 3,
        lhs_dilation=(STRIDE, STRIDE, STRIDE),
        dimension_numbers=('NCDHW', 'OIDHW', 'NCDHW'),
        precision=lax.Precision.HIGHEST)
    y = y + b_dec[None, :, None, None, None]
    y = (y - bn_mean[None, :, None, None, None]) / jnp.sqrt(bn_var[None, :, None, None, None] + BN_EPS)
    y = y * bn_gamma[None, :, None, None, None] + bn_beta[None, :, None, None, None]
    y = jnp.clip(y, 0.0, 6.0)                                        # ReLU6
    Co = w_dec.shape[1]
    out = jnp.einsum('ncdhw,oc->nodhw', y, w_proj.reshape(1, Co),
                     precision=lax.Precision.HIGHEST)
    return out + b_proj.reshape(1, 1, 1, 1, 1)


if __name__ == "__main__":
    # Small config consistent with SMiMDecoder(up_sample_ratio=4, width=16):
    # channels = [16, 8, 4] -> ConvTranspose3d(16 -> 4, k=32, s=16, p=8), BN(4), ReLU6, Conv3d(4 -> 1, k=1)
    WIDTH, UP_RATIO = 16, 4
    n = int(round(np.log2(UP_RATIO)))
    C_in = WIDTH
    C_out = WIDTH // (2 ** n)
    N, D, H, W = 2, 2, 2, 2

    key = jax.random.PRNGKey(0)
    keys = jax.random.split(key, 9)
    x = jax.random.normal(keys[0], (N, C_in, D, H, W), jnp.float32)
    w_dec = 0.02 * jax.random.normal(keys[1], (C_in, C_out, KSIZE, KSIZE, KSIZE), jnp.float32)
    b_dec = 0.01 * jax.random.normal(keys[2], (C_out,), jnp.float32)
    bn_gamma = 1.0 + 0.05 * jax.random.normal(keys[3], (C_out,), jnp.float32)
    bn_beta = 0.05 * jax.random.normal(keys[4], (C_out,), jnp.float32)
    bn_mean = 0.05 * jax.random.normal(keys[5], (C_out,), jnp.float32)
    bn_var = jnp.abs(1.0 + 0.05 * jax.random.normal(keys[6], (C_out,), jnp.float32))
    w_proj = 0.02 * jax.random.normal(keys[7], (1, C_out, 1, 1, 1), jnp.float32)
    b_proj = 0.01 * jax.random.normal(keys[8], (1,), jnp.float32)

    # One-time weight packing (cached outside the forward pass); v_tile is tied to the packing.
    w_pack, t_aff, wp_vec, bp_vec, v_tile = prepare_decoder_params(
        w_dec, b_dec, bn_gamma, bn_beta, bn_mean, bn_var, w_proj, b_proj, v_tile=512)
    w_pack, t_aff, wp_vec, bp_vec = jax.block_until_ready((w_pack, t_aff, wp_vec, bp_vec))

    out = smim_decoder_forward(x, w_pack, t_aff, wp_vec, bp_vec, v_tile=v_tile, r_tile=512)
    out = jax.block_until_ready(out)
    assert out.shape == (N, 1, STRIDE * D, STRIDE * H, STRIDE * W), out.shape

    ref = reference_forward(x, w_dec, b_dec, bn_gamma, bn_beta, bn_mean, bn_var, w_proj, b_proj)
    ref = jax.block_until_ready(ref)
    # bf16 matmul operands + bf16 kernel output vs f32/HIGHEST reference.
    np.testing.assert_allclose(np.asarray(out), np.asarray(ref), rtol=2e-2, atol=3e-3)

    print("KERNEL_OK")
</pallas_src>

<mosaic_0001>
module attributes {stable_mosaic.version = 11 : i64} {
  func.func @_decoder_kernel(%arg0: i32, %arg1: i32, %arg2: memref<32x128xbf16, #tpu.memory_space<vmem>>, %arg3: memref<128x2048xbf16, #tpu.memory_space<vmem>>, %arg4: memref<4xf32, #tpu.memory_space<smem>>, %arg5: memref<4xf32, #tpu.memory_space<smem>>, %arg6: memref<1xf32, #tpu.memory_space<smem>>, %arg7: memref<32x512xbf16, #tpu.memory_space<vmem>>) attributes {dimension_semantics = [#tpu.dimension_semantics<parallel>, #tpu.dimension_semantics<parallel>], iteration_bounds = array<i64: 8, 2>, scalar_prefetch = 0 : i64, scratch_operands = 0 : i64, tpu.core_type = #tpu.core_type<tc>, window_params = [{transform_indices = @transform_0, window_bounds = array<i64: 32, 128>}, {transform_indices = @transform_1, window_bounds = array<i64: 128, 2048>}, {transform_indices = @transform_2, window_bounds = array<i64: 4>}, {transform_indices = @transform_3, window_bounds = array<i64: 4>}, {transform_indices = @transform_4, window_bounds = array<i64: 1>}, {transform_indices = @transform_5, window_bounds = array<i64: 32, 512>}]} {
    %c0 = arith.constant 0 : index
    %c0_0 = arith.constant 0 : index
    %0 = vector.load %arg2[%c0, %c0_0] : memref<32x128xbf16, #tpu.memory_space<vmem>>, vector<32x128xbf16>
    %c0_1 = arith.constant 0 : index
    %c0_2 = arith.constant 0 : index
    %1 = vector.load %arg3[%c0_1, %c0_2] : memref<128x2048xbf16, #tpu.memory_space<vmem>>, vector<128x512xbf16>
    %cst = arith.constant dense<0.000000e+00> : vector<32x512xf32>
    %2 = tpu.matmul %0, %1, %cst {dimension_numbers = #tpu.dot_dimension_numbers<[1], [0], [0], [1], [0, 0, 1, 1], [], []>} : vector<32x128xbf16>, vector<128x512xbf16>, vector<32x512xf32> -> vector<32x512xf32>
    %c0_3 = arith.constant 0 : index
    %3 = memref.load %arg5[%c0_3] : memref<4xf32, #tpu.memory_space<smem>>
    %c0_4 = arith.constant 0 : index
    %4 = memref.load %arg4[%c0_4] : memref<4xf32, #tpu.memory_space<smem>>
    %5 = vector.broadcast %4 : f32 to vector<32x512xf32>
    %6 = arith.addf %2, %5 : vector<32x512xf32>
    %cst_5 = arith.constant 0.000000e+00 : f32
    %cst_6 = arith.constant 6.000000e+00 : f32
    %7 = vector.broadcast %cst_5 : f32 to vector<32x512xf32>
    %8 = arith.maximumf %7, %6 : vector<32x512xf32>
    %9 = vector.broadcast %cst_6 : f32 to vector<32x512xf32>
    %10 = arith.minimumf %9, %8 : vector<32x512xf32>
    %11 = vector.broadcast %3 : f32 to vector<32x512xf32>
    %12 = arith.mulf %11, %10 : vector<32x512xf32>
    %c0_7 = arith.constant 0 : index
    %c512 = arith.constant 512 : index
    %13 = vector.load %arg3[%c0_7, %c512] : memref<128x2048xbf16, #tpu.memory_space<vmem>>, vector<128x512xbf16>
    %cst_8 = arith.constant dense<0.000000e+00> : vector<32x512xf32>
    %14 = tpu.matmul %0, %13, %cst_8 {dimension_numbers = #tpu.dot_dimension_numbers<[1], [0], [0], [1], [0, 0, 1, 1], [], []>} : vector<32x128xbf16>, vector<128x512xbf16>, vector<32x512xf32> -> vector<32x512xf32>
    %c1 = arith.constant 1 : index
    %15 = memref.load %arg5[%c1] : memref<4xf32, #tpu.memory_space<smem>>
    %c1_9 = arith.constant 1 : index
    %16 = memref.load %arg4[%c1_9] : memref<4xf32, #tpu.memory_space<smem>>
    %17 = vector.broadcast %16 : f32 to vector<32x512xf32>
    %18 = arith.addf %14, %17 : vector<32x512xf32>
    %cst_10 = arith.constant 0.000000e+00 : f32
    %cst_11 = arith.constant 6.000000e+00 : f32
    %19 = vector.broadcast %cst_10 : f32 to vector<32x512xf32>
    %20 = arith.maximumf %19, %18 : vector<32x512xf32>
    %21 = vector.broadcast %cst_11 : f32 to vector<32x512xf32>
    %22 = arith.minimumf %21, %20 : vector<32x512xf32>
    %23 = vector.broadcast %15 : f32 to vector<32x512xf32>
    %24 = arith.mulf %23, %22 : vector<32x512xf32>
    %25 = arith.addf %12, %24 : vector<32x512xf32>
    %c0_12 = arith.constant 0 : index
    %c1024 = arith.constant 1024 : index
    %26 = vector.load %arg3[%c0_12, %c1024] : memref<128x2048xbf16, #tpu.memory_space<vmem>>, vector<128x512xbf16>
    %cst_13 = arith.constant dense<0.000000e+00> : vector<32x512xf32>
    %27 = tpu.matmul %0, %26, %cst_13 {dimension_numbers = #tpu.dot_dimension_numbers<[1], [0], [0], [1], [0, 0, 1, 1], [], []>} : vector<32x128xbf16>, vector<128x512xbf16>, vector<32x512xf32> -> vector<32x512xf32>
    %c2 = arith.constant 2 : index
    %28 = memref.load %arg5[%c2] : memref<4xf32, #tpu.memory_space<smem>>
    %c2_14 = arith.constant 2 : index
    %29 = memref.load %arg4[%c2_14] : memref<4xf32, #tpu.memory_space<smem>>
    %30 = vector.broadcast %29 : f32 to vector<32x512xf32>
    %31 = arith.addf %27, %30 : vector<32x512xf32>
    %cst_15 = arith.constant 0.000000e+00 : f32
    %cst_16 = arith.constant 6.000000e+00 : f32
    %32 = vector.broadcast %cst_15 : f32 to vector<32x512xf32>
    %33 = arith.maximumf %32, %31 : vector<32x512xf32>
    %34 = vector.broadcast %cst_16 : f32 to vector<32x512xf32>
    %35 = arith.minimumf %34, %33 : vector<32x512xf32>
    %36 = vector.broadcast %28 : f32 to vector<32x512xf32>
    %37 = arith.mulf %36, %35 : vector<32x512xf32>
    %38 = arith.addf %25, %37 : vector<32x512xf32>
    %c0_17 = arith.constant 0 : index
    %c1536 = arith.constant 1536 : index
    %39 = vector.load %arg3[%c0_17, %c1536] : memref<128x2048xbf16, #tpu.memory_space<vmem>>, vector<128x512xbf16>
    %cst_18 = arith.constant dense<0.000000e+00> : vector<32x512xf32>
    %40 = tpu.matmul %0, %39, %cst_18 {dimension_numbers = #tpu.dot_dimension_numbers<[1], [0], [0], [1], [0, 0, 1, 1], [], []>} : vector<32x128xbf16>, vector<128x512xbf16>, vector<32x512xf32> -> vector<32x512xf32>
    %c3 = arith.constant 3 : index
    %41 = memref.load %arg5[%c3] : memref<4xf32, #tpu.memory_space<smem>>
    %c3_19 = arith.constant 3 : index
    %42 = memref.load %arg4[%c3_19] : memref<4xf32, #tpu.memory_space<smem>>
    %43 = vector.broadcast %42 : f32 to vector<32x512xf32>
    %44 = arith.addf %40, %43 : vector<32x512xf32>
    %cst_20 = arith.constant 0.000000e+00 : f32
    %cst_21 = arith.constant 6.000000e+00 : f32
    %45 = vector.broadcast %cst_20 : f32 to vector<32x512xf32>
    %46 = arith.maximumf %45, %44 : vector<32x512xf32>
    %47 = vector.broadcast %cst_21 : f32 to vector<32x512xf32>
    %48 = arith.minimumf %47, %46 : vector<32x512xf32>
    %49 = vector.broadcast %41 : f32 to vector<32x512xf32>
    %50 = arith.mulf %49, %48 : vector<32x512xf32>
    %51 = arith.addf %38, %50 : vector<32x512xf32>
    %c0_22 = arith.constant 0 : index
    %52 = memref.load %arg6[%c0_22] : memref<1xf32, #tpu.memory_space<smem>>
    %53 = vector.broadcast %52 : f32 to vector<32x512xf32>
    %54 = arith.addf %51, %53 : vector<32x512xf32>
    %55 = arith.truncf %54 : vector<32x512xf32> to vector<32x512xbf16>
    %c0_23 = arith.constant 0 : index
    %c0_24 = arith.constant 0 : index
    %56 = vector.load %arg7[%c0_23, %c0_24] : memref<32x512xbf16, #tpu.memory_space<vmem>>, vector<32x512xbf16>
    tpu.vector_store %arg7[%c0_23, %c0_24], %55 {strides = array<i32>} : memref<32x512xbf16, #tpu.memory_space<vmem>>, vector<32x512xbf16>,
    return
  }
  func.func @transform_0(%arg0: i32, %arg1: i32) -> (i32, i32) {
    %c0_i32 = arith.constant 0 : i32
    %c0_i32_0 = arith.constant 0 : i32
    return %arg1, %c0_i32 : i32, i32
  }
  func.func @transform_1(%arg0: i32, %arg1: i32) -> (i32, i32) {
    %c0_i32 = arith.constant 0 : i32
    %c0_i32_0 = arith.constant 0 : i32
    return %c0_i32, %arg0 : i32, i32
  }
  func.func @transform_2(%arg0: i32, %arg1: i32) -> i32 {
    %c0_i32 = arith.constant 0 : i32
    %c0_i32_0 = arith.constant 0 : i32
    return %c0_i32 : i32
  }
  func.func @transform_3(%arg0: i32, %arg1: i32) -> i32 {
    %c0_i32 = arith.constant 0 : i32
    %c0_i32_0 = arith.constant 0 : i32
    return %c0_i32 : i32
  }
  func.func @transform_4(%arg0: i32, %arg1: i32) -> i32 {
    %c0_i32 = arith.constant 0 : i32
    %c0_i32_0 = arith.constant 0 : i32
    return %c0_i32 : i32
  }
  func.func @transform_5(%arg0: i32, %arg1: i32) -> (i32, i32) {
    %c0_i32 = arith.constant 0 : i32
    return %arg1, %arg0 : i32, i32
  }
}

</mosaic_0001>

<llo_original>
// kernel: smim_decoder_forward.1
$region0: #{smim_decoder_forward.1}
  #allocation0 [shape = 'u32[]', space=smem, size = 0x4, offset = 0x4, fixed_abs, tag = 'smem constant byte address 0x4 - core index']
  #allocation1 [shape = 'u32[144,128]{1,0:T(1,128)}', space=vmem, size = 0x12000, scoped, tag = 'internal scratch']
  #allocation2 [shape = 'f32[1]{0:T(128)S(6)}', space=smem, size = 0x200, scoped, tag = 'scoped memory for smim_decoder_forward.1']
  %s0 = inlined_call_operand.vmem [shape: bf16[64,128], index: 0, kind: input, shape index: {}]
  %s1 = inlined_call_operand.hbm [shape: bf16[128,16384], index: 1, kind: input, shape index: {}]
  %s2 = inlined_call_operand.hbm [shape: f32[4], index: 2, kind: input, shape index: {}]
  %s3 = inlined_call_operand.hbm [shape: f32[4], index: 3, kind: input, shape index: {}]
  %s4 = inlined_call_operand.<no memory space> [shape: f32[1], index: 4, kind: input, shape index: {}]
  %s5 = inlined_call_operand.vmem [shape: bf16[64,4096], index: 5, kind: output, shape index: {}]
  %s6 = sld [smem:[#allocation0]]
  $region84: #{smim_decoder_forward.1} parent=0
    _
  %s8 = ssub.s32 1, %s6
  %s9 = scalar_select 0, %s8, %s6
  %10 = sst [smem:[#allocation2]] %s4
  $region1: #{smim_decoder_forward.1} parent=0
    #allocation3 [shape = 'u8[1048576]{0}', space=vmem, size = 0x100000, scoped, tag = 'input window, operand 1']
    #allocation4 [shape = 's32[2]{0}', space=sflag, size = 0x8, scoped, tag = 'scoped memory for smim_decoder_forward.1']
    #allocation5 [shape = 's32[2]{0}', space=sflag, size = 0x8, scoped, tag = 'scoped memory for smim_decoder_forward.1']
    #allocation6 [shape = 'u8[512]{0}', space=smem, size = 0x200, scoped, tag = 'input window, operand 2, single buffered']
    #allocation7 [shape = 'u8[512]{0}', space=smem, size = 0x200, scoped, tag = 'input window, operand 3, single buffered']
    #allocation8 [shape = 's32[1]{0}', space=sflag, size = 0x4, scoped, tag = 'scoped memory for smim_decoder_forward.1']
    #allocation9 [shape = 'u8[65536]{0}', space=vmem, size = 0x10000, scoped, tag = 'output window, operand 0']
    %11 = vsyncpa [#allocation4], 0
    %s12 = scalar_lea.sflag [#allocation4], 1
    %13 = vsyncpa %s12, 0
    %14 = vsyncpa [#allocation5], 0
    %15 = vsyncpa [#allocation8], 0
    loop: start=0, step=1, limit=18
    $region2: #{smim_decoder_forward.1} parent=1 // loop_pre_header
      _
    $region3: #{smim_decoder_forward.1} parent=1 // loop_header
      %s17 = sphi 0, %s21
      %p18 = scmp.ge.s32.totalorder %s17, 18
      %s24 = sphi 0, %s36
      %s25 = sphi 0, %s32
      %s26 = sphi 0, %s24
      %s27 = sphi 0, %s25
      %s28 = sphi 0, %s26
      %s29 = sphi 0, %s27
      %s39 = sphi 0, %s41
      %s42 = sphi 0, %s39
      %s43 = sphi 0, %s42
      %s59 = sphi 0, %s43
      %s65 = sphi 0, %s67
      %s68 = sphi 0, %s65
      %s69 = sphi 0, %s68
      %s85 = sphi 0, %s69
      %s89 = sphi 0, %s89
      %s91 = sphi 0, %s89
      %s92 = sphi 0, %s91
      %s106 = sphi 0, %s92
      %s110 = sphi 0, %s110
      %s112 = sphi 0, %s110
      %s113 = sphi 0, %s112
      %s127 = sphi 0, %s113
      %s131 = sphi 0, %s131
      %s133 = sphi 0, %s131
      %s134 = sphi 0, %s133
      %s148 = sphi 0, %s134
      %s156 = sphi 0, %s158
      %s159 = sphi 0, %s156
      %s160 = sphi 0, %s159
      %s176 = sphi 0, %s160
    $region4: #{smim_decoder_forward.1} parent=1 // loop_header_branch
      %20 = sbr.rel (%p18) target = $region8
    $region5: #{smim_decoder_forward.1} parent=1 // loop_body
      %s22 = ssub.s32 %s17, 1
      %s23 = ssub.s32 %s17, 2
      %s30 = sadd.s32 1, %s25
      %p31 = scmp.ge.s32.totalorder %s30, 2
      %s32 = scalar_select %p31, 0, %s30
      %s33 = sadd.s32 1, %s24
      %s34 = scalar_select %p31, %s33, %s24
      %p35 = scmp.ge.s32.totalorder %s34, 8
      %s36 = scalar_select %p35, 0, %s34
      %s37 = ssub.s32 %s25, %s32
      %p38 = scmp.eq.s32.totalorder %s37, 0
      %s40 = sadd.s32 %s39, 1
      %s41 = scalar_select %p38, %s39, %s40
      %p44 = pneg %p38
      %p45 = scmp.eq.s32.totalorder %s17, 15
      %p46 = por %p44, %p45
      %p47 = scmp.ne.s32.totalorder %s39, %s42
      %p48 = scmp.eq.s32.totalorder %s17, 0
      %p49 = por %p47, %p48
      %p50 = scmp.ne.s32.totalorder %s39, %s42
      %p51 = scmp.eq.s32.totalorder %s22, 15
      %p52 = por %p50, %p51
      %p53 = scmp.ne.s32.totalorder %s42, %s43
      %p54 = scmp.eq.s32.totalorder %s22, 0
      %p55 = por %p53, %p54
      %p56 = scmp.ne.s32.totalorder %s42, %s43
      %p57 = scmp.eq.s32.totalorder %s23, 15
      %p58 = por %p56, %p57
      %p60 = scmp.ne.s32.totalorder %s43, %s59
      %p61 = scmp.eq.s32.totalorder %s23, 0
      %p62 = por %p60, %p61
      %s63 = ssub.s32 %s24, %s36
      %p64 = scmp.eq.s32.totalorder %s63, 0
      %s66 = sadd.s32 %s65, 1
      %s67 = scalar_select %p64, %s65, %s66
      %p70 = pneg %p64
      %p71 = scmp.eq.s32.totalorder %s17, 15
      %p72 = por %p70, %p71
      %p73 = scmp.ne.s32.totalorder %s65, %s68
      %p74 = scmp.eq.s32.totalorder %s17, 0
      %p75 = por %p73, %p74
      %p76 = scmp.ne.s32.totalorder %s65, %s68
      %p77 = scmp.eq.s32.totalorder %s22, 15
      %p78 = por %p76, %p77
      %p79 = scmp.ne.s32.totalorder %s68, %s69
      %p80 = scmp.eq.s32.totalorder %s22, 0
      %p81 = por %p79, %p80
      %p82 = scmp.ne.s32.totalorder %s68, %s69
      %p83 = scmp.eq.s32.totalorder %s23, 15
      %p84 = por %p82, %p83
      %p86 = scmp.ne.s32.totalorder %s69, %s85
      %p87 = scmp.eq.s32.totalorder %s23, 0
      %p88 = por %p86, %p87
      %s90 = sadd.s32 %s89, 1
      %p93 = scmp.eq.s32.totalorder %s17, 15
      %p94 = scmp.ne.s32.totalorder %s89, %s91
      %p95 = scmp.eq.s32.totalorder %s17, 0
      %p96 = por %p94, %p95
      %p97 = scmp.ne.s32.totalorder %s89, %s91
      %p98 = scmp.eq.s32.totalorder %s22, 15
      %p99 = por %p97, %p98
      %p100 = scmp.ne.s32.totalorder %s91, %s92
      %p101 = scmp.eq.s32.totalorder %s22, 0
      %p102 = por %p100, %p101
      %p103 = scmp.ne.s32.totalorder %s91, %s92
      %p104 = scmp.eq.s32.totalorder %s23, 15
      %p105 = por %p103, %p104
      %p107 = scmp.ne.s32.totalorder %s92, %s106
      %p108 = scmp.eq.s32.totalorder %s23, 0
      %p109 = por %p107, %p108
      %s111 = sadd.s32 %s110, 1
      %p114 = scmp.eq.s32.totalorder %s17, 15
      %p115 = scmp.ne.s32.totalorder %s110, %s112
      %p116 = scmp.eq.s32.totalorder %s17, 0
      %p117 = por %p115, %p116
      %p118 = scmp.ne.s32.totalorder %s110, %s112
      %p119 = scmp.eq.s32.totalorder %s22, 15
      %p120 = por %p118, %p119
      %p121 = scmp.ne.s32.totalorder %s112, %s113
      %p122 = scmp.eq.s32.totalorder %s22, 0
      %p123 = por %p121, %p122
      %p124 = scmp.ne.s32.totalorder %s112, %s113
      %p125 = scmp.eq.s32.totalorder %s23, 15
      %p126 = por %p124, %p125
      %p128 = scmp.ne.s32.totalorder %s113, %s127
      %p129 = scmp.eq.s32.totalorder %s23, 0
      %p130 = por %p128, %p129
      %s132 = sadd.s32 %s131, 1
      %p135 = scmp.eq.s32.totalorder %s17, 15
      %p136 = scmp.ne.s32.totalorder %s131, %s133
      %p137 = scmp.eq.s32.totalorder %s17, 0
      %p138 = por %p136, %p137
      %p139 = scmp.ne.s32.totalorder %s131, %s133
      %p140 = scmp.eq.s32.totalorder %s22, 15
      %p141 = por %p139, %p140
      %p142 = scmp.ne.s32.totalorder %s133, %s134
      %p143 = scmp.eq.s32.totalorder %s22, 0
      %p144 = por %p142, %p143
      %p145 = scmp.ne.s32.totalorder %s133, %s134
      %p146 = scmp.eq.s32.totalorder %s23, 15
      %p147 = por %p145, %p146
      %p149 = scmp.ne.s32.totalorder %s134, %s148
      %p150 = scmp.eq.s32.totalorder %s23, 0
      %p151 = por %p149, %p150
      %s152 = ssub.s32 %s25, %s32
      %s153 = ssub.s32 %s24, %s36
      %s154 = sor.u32 %s152, %s153
      %p155 = scmp.eq.s32.totalorder %s154, 0
      %s157 = sadd.s32 %s156, 1
      %s158 = scalar_select %p155, %s156, %s157
      %p161 = pneg %p155
      %p162 = scmp.eq.s32.totalorder %s17, 15
      %p163 = por %p161, %p162
      %p164 = scmp.ne.s32.totalorder %s156, %s159
      %p165 = scmp.eq.s32.totalorder %s17, 0
      %p166 = por %p164, %p165
      %p167 = scmp.ne.s32.totalorder %s156, %s159
      %p168 = scmp.eq.s32.totalorder %s22, 15
      %p169 = por %p167, %p168
      %p170 = scmp.ne.s32.totalorder %s159, %s160
      %p171 = scmp.eq.s32.totalorder %s22, 0
      %p172 = por %p170, %p171
      %p173 = scmp.ne.s32.totalorder %s159, %s160
      %p174 = scmp.eq.s32.totalorder %s23, 15
      %p175 = por %p173, %p174
      %p177 = scmp.ne.s32.totalorder %s160, %s176
      %p178 = scmp.eq.s32.totalorder %s23, 0
      %p179 = por %p177, %p178
      %p180 = scmp.le.s32.totalorder 1, %s17
      %p181 = scmp.lt.s32.totalorder %s17, 17
      %p182 = pnand %p180, %p181
      %p183 = pneg %p182
      // Predicated region
      $region9: #{smim_decoder_forward.1} parent=5 // pred_check
        _
      $region10: #{smim_decoder_forward.1} parent=5 // pred_check_branch
        %185 = sbr.rel (%p182) target = $region12
      $region11: #{smim_decoder_forward.1} parent=5 // pred_region
        %s186 = ssub.s32 %s17, 1
        // Predicated region
        $region13: #{smim_decoder_forward.1} parent=11 // pred_check
          %p187 = pneg %p102
        $region14: #{smim_decoder_forward.1} parent=11 // pred_check_branch
          %189 = sbr.rel (%p187) target = $region16
        $region15: #{smim_decoder_forward.1} parent=11 // pred_region
          %s191 = ssub.s32 16, 16
          %192 = vsyncadd [#allocation5], %s191
          %195 = dma.hbm_to_smem %s2, 16, [#allocation6], [#allocation5]
        $region16: #{smim_decoder_forward.1} parent=11 // pred_fallthru
          _
        // Predicated region
        $region17: #{smim_decoder_forward.1} parent=11 // pred_check
          %p196 = pneg %p123
        $region18: #{smim_decoder_forward.1} parent=11 // pred_check_branch
          %198 = sbr.rel (%p196) target = $region20
        $region19: #{smim_decoder_forward.1} parent=11 // pred_region
          %s200 = ssub.s32 16, 16
          %201 = vsyncadd [#allocation8], %s200
          %204 = dma.hbm_to_smem %s3, 16, [#allocation7], [#allocation8]
        $region20: #{smim_decoder_forward.1} parent=11 // pred_fallthru
          _
        // Predicated region
        $region21: #{smim_decoder_forward.1} parent=11 // pred_check
          %p205 = pneg %p144
        $region22: #{smim_decoder_forward.1} parent=11 // pred_check_branch
          %207 = sbr.rel (%p205) target = $region24
        $region23: #{smim_decoder_forward.1} parent=11 // pred_region
          _
        $region24: #{smim_decoder_forward.1} parent=11 // pred_fallthru
          _
      $region12: #{smim_decoder_forward.1} parent=5 // pred_fallthru
        _
      %p208 = scmp.lt.s32.totalorder %s17, 16
      // Predicated region
      $region25: #{smim_decoder_forward.1} parent=5 // pred_check
        %p209 = pneg %p208
      $region26: #{smim_decoder_forward.1} parent=5 // pred_check_branch
        %211 = sbr.rel (%p209) target = $region28
      $region27: #{smim_decoder_forward.1} parent=5 // pred_region
        // Predicated region
        $region29: #{smim_decoder_forward.1} parent=27 // pred_check
          %p212 = pneg %p49
        $region30: #{smim_decoder_forward.1} parent=27 // pred_check_branch
          %214 = sbr.rel (%p212) target = $region32
        $region31: #{smim_decoder_forward.1} parent=27 // pred_region
          %s215 = smul.u32 4, %s25
          %p216 = scmp.lt.s32.totalorder %s215, 7
          %s217 = scalar_select %p216, %s215, 7
          %s218 = smul.addr %s217, 4
          %s219 = scalar_lea.vmem %s0, %s218
          %s220 = smul.u32 4, %s25
        $region32: #{smim_decoder_forward.1} parent=27 // pred_fallthru
          _
        // Predicated region
        $region33: #{smim_decoder_forward.1} parent=27 // pred_check
          %p221 = pneg %p75
        $region34: #{smim_decoder_forward.1} parent=27 // pred_check_branch
          %223 = sbr.rel (%p221) target = $region36
        $region35: #{smim_decoder_forward.1} parent=27 // pred_region
          %s224 = sand.u32 %s65, 1
          %s225 = scalar_lea.sflag [#allocation4], %s224
          %s226 = sand.u32 %s65, 1
          %s227 = smul.addr %s226, 1024
          %s228 = scalar_lea.vmem [#allocation3], %s227
          %s229 = smul.u32 16, %s24
          %s231 = ssub.s32 16384, 16384
          %232 = vsyncadd %s225, %s231
          %s233 = smul.addr %s229, 64
          %s234 = scalar_lea.hbm %s1, %s233
          %s235 = sshll.u32 %s228, 4
          %s236 = int_to_ptr.vmem [resolvable:$true] %s235
          %241 = dma.hbm_to_vmem [thread:$0]  %s234, 16384, %s236, %s225, 8192, 1024, 64
        $region36: #{smim_decoder_forward.1} parent=27 // pred_fallthru
          _
      $region28: #{smim_decoder_forward.1} parent=5 // pred_fallthru
        _
      %p242 = scmp.le.s32.totalorder 1, %s17
      %p243 = scmp.lt.s32.totalorder %s17, 17
      %p244 = pnand %p242, %p243
      %p245 = pneg %p244
      // Predicated region
      $region37: #{smim_decoder_forward.1} parent=5 // pred_check
        _
      $region38: #{smim_decoder_forward.1} parent=5 // pred_check_branch
        %247 = sbr.rel (%p244) target = $region40
      $region39: #{smim_decoder_forward.1} parent=5 // pred_region
        %s248 = ssub.s32 %s17, 1
        %s249 = sand.u32 %s68, 1
        %s250 = scalar_lea.sflag [#allocation4], %s249
        %s251 = sand.u32 %s68, 1
        %s252 = smul.addr %s251, 1024
        %s253 = scalar_lea.vmem [#allocation3], %s252
        // Predicated region
        $region41: #{smim_decoder_forward.1} parent=39 // pred_check
          %p254 = pneg %p81
        $region42: #{smim_decoder_forward.1} parent=39 // pred_check_branch
          %256 = sbr.rel (%p254) target = $region44
        $region43: #{smim_decoder_forward.1} parent=39 // pred_region
          %257 = dma.done %s250, 16384
        $region44: #{smim_decoder_forward.1} parent=39 // pred_fallthru
          _
        // Predicated region
        $region45: #{smim_decoder_forward.1} parent=39 // pred_check
          %p258 = pneg %p102
        $region46: #{smim_decoder_forward.1} parent=39 // pred_check_branch
          %260 = sbr.rel (%p258) target = $region48
        $region47: #{smim_decoder_forward.1} parent=39 // pred_region
          %261 = dma.done [#allocation5], 16
        $region48: #{smim_decoder_forward.1} parent=39 // pred_fallthru
          _
        // Predicated region
        $region49: #{smim_decoder_forward.1} parent=39 // pred_check
          %p262 = pneg %p123
        $region50: #{smim_decoder_forward.1} parent=39 // pred_check_branch
          %264 = sbr.rel (%p262) target = $region52
        $region51: #{smim_decoder_forward.1} parent=39 // pred_region
          %265 = dma.done [#allocation8], 16
        $region52: #{smim_decoder_forward.1} parent=39 // pred_fallthru
          _
        %266 = sfence
        %s267 = smul.u32 4, %s27
        %p268 = scmp.lt.s32.totalorder %s267, 7
        %s269 = scalar_select %p268, %s267, 7
        %s270 = smul.addr %s269, 4
        %s271 = scalar_lea.vmem %s0, %s270
        %p272 = pneg %p55
        %p273 = pneg %p52
        %s274 = sand.u32 %s68, 1
        %s275 = scalar_lea.sflag [#allocation4], %s274
        %s276 = sand.u32 %s68, 1
        %s277 = smul.addr %s276, 1024
        %s278 = scalar_lea.vmem [#allocation3], %s277
        %p279 = pneg %p81
        %p280 = pneg %p78
        %p281 = pneg %p102
        %p282 = pneg %p99
        %p283 = pneg %p123
        %p284 = pneg %p120
        %p285 = pneg %p144
        %p286 = pneg %p141
        %p287 = pneg %p172
        %p288 = pneg %p169
        %s289 = sand.u32 %s159, 1
        %s290 = sand.u32 %s159, 1
        %s291 = smul.addr %s290, 64
        %s292 = scalar_lea.vmem [#allocation9], %s291
        %s293 = smul.u32 4, %s27
        %p294 = scmp.lt.s32.totalorder %s293, 7
        %s295 = scalar_select %p294, %s293, 7
        %s296 = smul.addr %s295, 4
        %s297 = scalar_lea.vmem %s0, %s296
        %s298 = smul.u32 4, %s27
        %s299 = smul.u32 16, %s26
        %s300 = smul.u32 4, %s27
        %s301 = smul.u32 4, %s26
        %v303 = vld [vmem:[%s297] sm:$0xf]
        %v304 = vld [vmem:[%s297 + $0x4] sm:$0xf]
        %v305 = vld [vmem:[%s297 + $0x8] sm:$0xf]
        %v306 = vld [vmem:[%s297 + $0xc] sm:$0xf]
        %v307 = vld [vmem:[%s253] sm:$0xff]
        %v308 = vld [vmem:[%s253 + $0x8] sm:$0xff]
        %v309 = vld [vmem:[%s253 + $0x40] sm:$0xff]
        %v310 = vld [vmem:[%s253 + $0x48] sm:$0xff]
        %v311 = vld [vmem:[%s253 + $0x80] sm:$0xff]
        %v312 = vld [vmem:[%s253 + $0x88] sm:$0xff]
        %v313 = vld [vmem:[%s253 + $0xc0] sm:$0xff]
        %v314 = vld [vmem:[%s253 + $0xc8] sm:$0xff]
        %v315 = vld [vmem:[%s253 + $0x100] sm:$0xff]
        %v316 = vld [vmem:[%s253 + $0x108] sm:$0xff]
        %v317 = vld [vmem:[%s253 + $0x140] sm:$0xff]
        %v318 = vld [vmem:[%s253 + $0x148] sm:$0xff]
        %v319 = vld [vmem:[%s253 + $0x180] sm:$0xff]
        %v320 = vld [vmem:[%s253 + $0x188] sm:$0xff]
        %v321 = vld [vmem:[%s253 + $0x1c0] sm:$0xff]
        %v322 = vld [vmem:[%s253 + $0x1c8] sm:$0xff]
        %v323 = vld [vmem:[%s253 + $0x200] sm:$0xff]
        %v324 = vld [vmem:[%s253 + $0x208] sm:$0xff]
        %v325 = vld [vmem:[%s253 + $0x240] sm:$0xff]
        %v326 = vld [vmem:[%s253 + $0x248] sm:$0xff]
        %v327 = vld [vmem:[%s253 + $0x280] sm:$0xff]
        %v328 = vld [vmem:[%s253 + $0x288] sm:$0xff]
        %v329 = vld [vmem:[%s253 + $0x2c0] sm:$0xff]
        %v330 = vld [vmem:[%s253 + $0x2c8] sm:$0xff]
        %v331 = vld [vmem:[%s253 + $0x300] sm:$0xff]
        %v332 = vld [vmem:[%s253 + $0x308] sm:$0xff]
        %v333 = vld [vmem:[%s253 + $0x340] sm:$0xff]
        %v334 = vld [vmem:[%s253 + $0x348] sm:$0xff]
        %v335 = vld [vmem:[%s253 + $0x380] sm:$0xff]
        %v336 = vld [vmem:[%s253 + $0x388] sm:$0xff]
        %v337 = vld [vmem:[%s253 + $0x3c0] sm:$0xff]
        %v338 = vld [vmem:[%s253 + $0x3c8] sm:$0xff]
        %s339 = sld [smem:[#allocation7]]
        %s340 = sld [smem:[#allocation6]]
        %v341 = vstv %s340
        %v346 = vunpack.c.l.b16 %v303
        %v347 = vunpack.c.l.b16 %v304
        %v348 = vunpack.c.l.b16 %v305
        %v349 = vunpack.c.l.b16 %v306
        %v350 = vpack.c.b16 %v347, %v346
        %v351 = vpack.c.b16 %v349, %v348
        %v386 = vunpack.c.l.b16 %v307
        %v387 = vunpack.c.h.b16 %v307
        %v388 = vunpack.c.l.b16 %v308
        %v389 = vunpack.c.h.b16 %v308
        %v390 = vunpack.c.l.b16 %v309
        %v391 = vunpack.c.h.b16 %v309
        %v392 = vunpack.c.l.b16 %v310
        %v393 = vunpack.c.h.b16 %v310
        %v394 = vunpack.c.l.b16 %v311
        %v395 = vunpack.c.h.b16 %v311
        %v396 = vunpack.c.l.b16 %v312
        %v397 = vunpack.c.h.b16 %v312
        %v398 = vunpack.c.l.b16 %v313
        %v399 = vunpack.c.h.b16 %v313
        %v400 = vunpack.c.l.b16 %v314
        %v401 = vunpack.c.h.b16 %v314
        %v402 = vunpack.c.l.b16 %v315
        %v403 = vunpack.c.h.b16 %v315
        %v404 = vunpack.c.l.b16 %v316
        %v405 = vunpack.c.h.b16 %v316
        %v406 = vunpack.c.l.b16 %v317
        %v407 = vunpack.c.h.b16 %v317
        %v408 = vunpack.c.l.b16 %v318
        %v409 = vunpack.c.h.b16 %v318
        %v410 = vunpack.c.l.b16 %v319
        %v411 = vunpack.c.h.b16 %v319
        %v412 = vunpack.c.l.b16 %v320
        %v413 = vunpack.c.h.b16 %v320
        %v414 = vunpack.c.l.b16 %v321
        %v415 = vunpack.c.h.b16 %v321
        %v416 = vunpack.c.l.b16 %v322
        %v417 = vunpack.c.h.b16 %v322
        %v418 = vunpack.c.l.b16 %v323
        %v419 = vunpack.c.h.b16 %v323
        %v420 = vunpack.c.l.b16 %v324
        %v421 = vunpack.c.h.b16 %v324
        %v422 = vunpack.c.l.b16 %v325
        %v423 = vunpack.c.h.b16 %v325
        %v424 = vunpack.c.l.b16 %v326
        %v425 = vunpack.c.h.b16 %v326
        %v426 = vunpack.c.l.b16 %v327
        %v427 = vunpack.c.h.b16 %v327
        %v428 = vunpack.c.l.b16 %v328
        %v429 = vunpack.c.h.b16 %v328
        %v430 = vunpack.c.l.b16 %v329
        %v431 = vunpack.c.h.b16 %v329
        %v432 = vunpack.c.l.b16 %v330
        %v433 = vunpack.c.h.b16 %v330
        %v434 = vunpack.c.l.b16 %v331
        %v435 = vunpack.c.h.b16 %v331
        %v436 = vunpack.c.l.b16 %v332
        %v437 = vunpack.c.h.b16 %v332
        %v438 = vunpack.c.l.b16 %v333
        %v439 = vunpack.c.h.b16 %v333
        %v440 = vunpack.c.l.b16 %v334
        %v441 = vunpack.c.h.b16 %v334
        %v442 = vunpack.c.l.b16 %v335
        %v443 = vunpack.c.h.b16 %v335
        %v444 = vunpack.c.l.b16 %v336
        %v445 = vunpack.c.h.b16 %v336
        %v446 = vunpack.c.l.b16 %v337
        %v447 = vunpack.c.h.b16 %v337
        %v448 = vunpack.c.l.b16 %v338
        %v449 = vunpack.c.h.b16 %v338
        %v450 = vpack.c.b16 %v390, %v386
        %v451 = vpack.c.b16 %v391, %v387
        %v452 = vpack.c.b16 %v392, %v388
        %v453 = vpack.c.b16 %v393, %v389
        %v454 = vpack.c.b16 %v398, %v394
        %v455 = vpack.c.b16 %v399, %v395
        %v456 = vpack.c.b16 %v400, %v396
        %v457 = vpack.c.b16 %v401, %v397
        %v458 = vpack.c.b16 %v406, %v402
        %v459 = vpack.c.b16 %v407, %v403
        %v460 = vpack.c.b16 %v408, %v404
        %v461 = vpack.c.b16 %v409, %v405
        %v462 = vpack.c.b16 %v414, %v410
        %v463 = vpack.c.b16 %v415, %v411
        %v464 = vpack.c.b16 %v416, %v412
        %v465 = vpack.c.b16 %v417, %v413
        %v466 = vpack.c.b16 %v422, %v418
        %v467 = vpack.c.b16 %v423, %v419
        %v468 = vpack.c.b16 %v424, %v420
        %v469 = vpack.c.b16 %v425, %v421
        %v470 = vpack.c.b16 %v430, %v426
        %v471 = vpack.c.b16 %v431, %v427
        %v472 = vpack.c.b16 %v432, %v428
        %v473 = vpack.c.b16 %v433, %v429
        %v474 = vpack.c.b16 %v438, %v434
        %v475 = vpack.c.b16 %v439, %v435
        %v476 = vpack.c.b16 %v440, %v436
        %v477 = vpack.c.b16 %v441, %v437
        %v478 = vpack.c.b16 %v446, %v442
        %v479 = vpack.c.b16 %v447, %v443
        %v480 = vpack.c.b16 %v448, %v444
        %v481 = vpack.c.b16 %v449, %v445
        %514 = vmatprep.subr.bf16.mxu0 %v451
        %515 = vmatpush1.bf16.msra.mxu0 %v450
        %516 = vmatprep.subr.bf16.mxu0 %v455
        %517 = vmatpush1.bf16.msra.mxu0 %v454
        %518 = vmatprep.subr.bf16.mxu0 %v459
        %519 = vmatpush1.bf16.msra.mxu0 %v458
        %520 = vmatprep.subr.bf16.mxu0 %v463
        %521 = vmatpush1.bf16.msra.mxu0 %v462
        %522 = vmatprep.subr.bf16.mxu0 %v467
        %523 = vmatpush1.bf16.msra.mxu0 %v466
        %524 = vmatprep.subr.bf16.mxu0 %v471
        %525 = vmatpush1.bf16.msra.mxu0 %v470
        %526 = vmatprep.subr.bf16.mxu0 %v475
        %527 = vmatpush1.bf16.msra.mxu0 %v474
        %528 = vmatprep.subr.bf16.mxu0 %v479
        %529 = vmatpush1.bf16.msra.mxu0 %v478
        %530 = vmatprep.subr.bf16.mxu0 0
        %531 = vmatpush1.bf16.msra.mxu0 0
        %532 = vmatprep.subr.bf16.mxu0 0
        %533 = vmatpush1.bf16.msra.mxu0 0
        %534 = vmatprep.subr.bf16.mxu0 0
        %535 = vmatpush1.bf16.msra.mxu0 0
        %536 = vmatprep.subr.bf16.mxu0 0
        %537 = vmatpush1.bf16.msra.mxu0 0
        %538 = vmatprep.subr.bf16.mxu0 0
        %539 = vmatpush1.bf16.msra.mxu0 0
        %540 = vmatprep.subr.bf16.mxu0 0
        %541 = vmatpush1.bf16.msra.mxu0 0
        %542 = vmatprep.subr.bf16.mxu0 0
        %543 = vmatpush1.bf16.msra.mxu0 0
        %544 = vmatprep.subr.bf16.mxu0 0
        %545 = vmatpush1.bf16.msra.mxu0 0
        %546 = vmatprep.mubr.bf16.mxu0 0
        %547 = vmatmul.mubr.bf16.gmra.mrb[0].mxu0 %v350
        %v548 = vpop.f32.mrb[0].mxu0
        %v549 = vadd.f32 %v341, %v548
        %v550 = vpop.f32.mrb[0].mxu0
        %v551 = vadd.f32 %v341, %v550
        %v552 = vpop.f32.mrb[0].mxu0
        %v553 = vadd.f32 %v341, %v552
        %v554 = vpop.f32.mrb[0].mxu0
        %v555 = vadd.f32 %v341, %v554
        %556 = vmatprep.mubr.bf16.mxu0 0
        %557 = vmatmul.mubr.bf16.gmra.mrb[0].mxu0 %v351
        %v558 = vpop.f32.mrb[0].mxu0
        %v559 = vadd.f32 %v341, %v558
        %v560 = vpop.f32.mrb[0].mxu0
        %v561 = vadd.f32 %v341, %v560
        %v562 = vpop.f32.mrb[0].mxu0
        %v563 = vadd.f32 %v341, %v562
        %v564 = vpop.f32.mrb[0].mxu0
        %v565 = vadd.f32 %v341, %v564
        %566 = vdwg.mxu0
        %567 = vmatprep.subr.bf16.mxu0 %v453
        %568 = vmatpush1.bf16.msra.mxu0 %v452
        %569 = vmatprep.subr.bf16.mxu0 %v457
        %570 = vmatpush1.bf16.msra.mxu0 %v456
        %571 = vmatprep.subr.bf16.mxu0 %v461
        %572 = vmatpush1.bf16.msra.mxu0 %v460
        %573 = vmatprep.subr.bf16.mxu0 %v465
        %574 = vmatpush1.bf16.msra.mxu0 %v464
        %575 = vmatprep.subr.bf16.mxu0 %v469
        %576 = vmatpush1.bf16.msra.mxu0 %v468
        %577 = vmatprep.subr.bf16.mxu0 %v473
        %578 = vmatpush1.bf16.msra.mxu0 %v472
        %579 = vmatprep.subr.bf16.mxu0 %v477
        %580 = vmatpush1.bf16.msra.mxu0 %v476
        %581 = vmatprep.subr.bf16.mxu0 %v481
        %582 = vmatpush1.bf16.msra.mxu0 %v480
        %583 = vmatprep.subr.bf16.mxu0 0
        %584 = vmatpush1.bf16.msra.mxu0 0
        %585 = vmatprep.subr.bf16.mxu0 0
        %586 = vmatpush1.bf16.msra.mxu0 0
        %587 = vmatprep.subr.bf16.mxu0 0
        %588 = vmatpush1.bf16.msra.mxu0 0
        %589 = vmatprep.subr.bf16.mxu0 0
        %590 = vmatpush1.bf16.msra.mxu0 0
        %591 = vmatprep.subr.bf16.mxu0 0
        %592 = vmatpush1.bf16.msra.mxu0 0
        %593 = vmatprep.subr.bf16.mxu0 0
        %594 = vmatpush1.bf16.msra.mxu0 0
        %595 = vmatprep.subr.bf16.mxu0 0
        %596 = vmatpush1.bf16.msra.mxu0 0
        %597 = vmatprep.subr.bf16.mxu0 0
        %598 = vmatpush1.bf16.msra.mxu0 0
        %599 = vmatprep.mubr.bf16.mxu0 0
        %600 = vmatmul.mubr.bf16.gmra.mrb[0].mxu0 %v350
        %v601 = vpop.f32.mrb[0].mxu0
        %v602 = vadd.f32 %v341, %v601
        %v603 = vpop.f32.mrb[0].mxu0
        %v604 = vadd.f32 %v341, %v603
        %v605 = vpop.f32.mrb[0].mxu0
        %v606 = vadd.f32 %v341, %v605
        %v607 = vpop.f32.mrb[0].mxu0
        %v608 = vadd.f32 %v341, %v607
        %609 = vmatprep.mubr.bf16.mxu0 0
        %610 = vmatmul.mubr.bf16.gmra.mrb[0].mxu0 %v351
        %v611 = vpop.f32.mrb[0].mxu0
        %v612 = vadd.f32 %v341, %v611
        %v613 = vpop.f32.mrb[0].mxu0
        %v614 = vadd.f32 %v341, %v613
        %v615 = vpop.f32.mrb[0].mxu0
        %v616 = vadd.f32 %v341, %v615
        %v617 = vpop.f32.mrb[0].mxu0
        %v618 = vadd.f32 %v341, %v617
        %619 = vdwg.mxu0
        %v620 = vmax.f32 %v549, 0.0
        %v621 = vmax.f32 %v551, 0.0
        %v622 = vmax.f32 %v602, 0.0
        %v623 = vmax.f32 %v604, 0.0
        %v624 = vmax.f32 %v553, 0.0
        %v625 = vmax.f32 %v555, 0.0
        %v626 = vmax.f32 %v606, 0.0
        %v627 = vmax.f32 %v608, 0.0
        %v628 = vmax.f32 %v559, 0.0
        %v629 = vmax.f32 %v561, 0.0
        %v630 = vmax.f32 %v612, 0.0
        %v631 = vmax.f32 %v614, 0.0
        %v632 = vmax.f32 %v563, 0.0
        %v633 = vmax.f32 %v565, 0.0
        %v634 = vmax.f32 %v616, 0.0
        %v635 = vmax.f32 %v618, 0.0
        %v636 = vmin.f32 %v620, 6.0
        %v637 = vmin.f32 %v621, 6.0
        %v638 = vmin.f32 %v622, 6.0
        %v639 = vmin.f32 %v623, 6.0
        %v640 = vmin.f32 %v624, 6.0
        %v641 = vmin.f32 %v625, 6.0
        %v642 = vmin.f32 %v626, 6.0
        %v643 = vmin.f32 %v627, 6.0
        %v644 = vmin.f32 %v628, 6.0
        %v645 = vmin.f32 %v629, 6.0
        %v646 = vmin.f32 %v630, 6.0
        %v647 = vmin.f32 %v631, 6.0
        %v648 = vmin.f32 %v632, 6.0
        %v649 = vmin.f32 %v633, 6.0
        %v650 = vmin.f32 %v634, 6.0
        %v651 = vmin.f32 %v635, 6.0
        %v652 = vstv %s339
        %v653 = vmul.f32 %v652, %v636
        %v654 = vmul.f32 %v652, %v637
        %v655 = vmul.f32 %v652, %v638
        %v656 = vmul.f32 %v652, %v639
        %v657 = vmul.f32 %v652, %v640
        %v658 = vmul.f32 %v652, %v641
        %v659 = vmul.f32 %v652, %v642
        %v660 = vmul.f32 %v652, %v643
        %v661 = vmul.f32 %v652, %v644
        %v662 = vmul.f32 %v652, %v645
        %v663 = vmul.f32 %v652, %v646
        %v664 = vmul.f32 %v652, %v647
        %v665 = vmul.f32 %v652, %v648
        %v666 = vmul.f32 %v652, %v649
        %v667 = vmul.f32 %v652, %v650
        %v668 = vmul.f32 %v652, %v651
        %v669 = vld [vmem:[%s253 + $0x10] sm:$0xff]
        %v670 = vld [vmem:[%s253 + $0x18] sm:$0xff]
        %v671 = vld [vmem:[%s253 + $0x50] sm:$0xff]
        %v672 = vld [vmem:[%s253 + $0x58] sm:$0xff]
        %v673 = vld [vmem:[%s253 + $0x90] sm:$0xff]
        %v674 = vld [vmem:[%s253 + $0x98] sm:$0xff]
        %v675 = vld [vmem:[%s253 + $0xd0] sm:$0xff]
        %v676 = vld [vmem:[%s253 + $0xd8] sm:$0xff]
        %v677 = vld [vmem:[%s253 + $0x110] sm:$0xff]
        %v678 = vld [vmem:[%s253 + $0x118] sm:$0xff]
        %v679 = vld [vmem:[%s253 + $0x150] sm:$0xff]
        %v680 = vld [vmem:[%s253 + $0x158] sm:$0xff]
        %v681 = vld [vmem:[%s253 + $0x190] sm:$0xff]
        %v682 = vld [vmem:[%s253 + $0x198] sm:$0xff]
        %v683 = vld [vmem:[%s253 + $0x1d0] sm:$0xff]
        %v684 = vld [vmem:[%s253 + $0x1d8] sm:$0xff]
        %v685 = vld [vmem:[%s253 + $0x210] sm:$0xff]
        %v686 = vld [vmem:[%s253 + $0x218] sm:$0xff]
        %v687 = vld [vmem:[%s253 + $0x250] sm:$0xff]
        %v688 = vld [vmem:[%s253 + $0x258] sm:$0xff]
        %v689 = vld [vmem:[%s253 + $0x290] sm:$0xff]
        %v690 = vld [vmem:[%s253 + $0x298] sm:$0xff]
        %v691 = vld [vmem:[%s253 + $0x2d0] sm:$0xff]
        %v692 = vld [vmem:[%s253 + $0x2d8] sm:$0xff]
        %v693 = vld [vmem:[%s253 + $0x310] sm:$0xff]
        %v694 = vld [vmem:[%s253 + $0x318] sm:$0xff]
        %v695 = vld [vmem:[%s253 + $0x350] sm:$0xff]
        %v696 = vld [vmem:[%s253 + $0x358] sm:$0xff]
        %v697 = vld [vmem:[%s253 + $0x390] sm:$0xff]
        %v698 = vld [vmem:[%s253 + $0x398] sm:$0xff]
        %v699 = vld [vmem:[%s253 + $0x3d0] sm:$0xff]
        %v700 = vld [vmem:[%s253 + $0x3d8] sm:$0xff]
        %s701 = sld [smem:[#allocation7 + $0x1]]
        %s702 = sld [smem:[#allocation6 + $0x1]]
        %v703 = vstv %s702
        %v736 = vunpack.c.l.b16 %v669
        %v737 = vunpack.c.h.b16 %v669
        %v738 = vunpack.c.l.b16 %v670
        %v739 = vunpack.c.h.b16 %v670
        %v740 = vunpack.c.l.b16 %v671
        %v741 = vunpack.c.h.b16 %v671
        %v742 = vunpack.c.l.b16 %v672
        %v743 = vunpack.c.h.b16 %v672
        %v744 = vunpack.c.l.b16 %v673
        %v745 = vunpack.c.h.b16 %v673
        %v746 = vunpack.c.l.b16 %v674
        %v747 = vunpack.c.h.b16 %v674
        %v748 = vunpack.c.l.b16 %v675
        %v749 = vunpack.c.h.b16 %v675
        %v750 = vunpack.c.l.b16 %v676
        %v751 = vunpack.c.h.b16 %v676
        %v752 = vunpack.c.l.b16 %v677
        %v753 = vunpack.c.h.b16 %v677
        %v754 = vunpack.c.l.b16 %v678
        %v755 = vunpack.c.h.b16 %v678
        %v756 = vunpack.c.l.b16 %v679
        %v757 = vunpack.c.h.b16 %v679
        %v758 = vunpack.c.l.b16 %v680
        %v759 = vunpack.c.h.b16 %v680
        %v760 = vunpack.c.l.b16 %v681
        %v761 = vunpack.c.h.b16 %v681
        %v762 = vunpack.c.l.b16 %v682
        %v763 = vunpack.c.h.b16 %v682
        %v764 = vunpack.c.l.b16 %v683
        %v765 = vunpack.c.h.b16 %v683
        %v766 = vunpack.c.l.b16 %v684
        %v767 = vunpack.c.h.b16 %v684
        %v768 = vunpack.c.l.b16 %v685
        %v769 = vunpack.c.h.b16 %v685
        %v770 = vunpack.c.l.b16 %v686
        %v771 = vunpack.c.h.b16 %v686
        %v772 = vunpack.c.l.b16 %v687
        %v773 = vunpack.c.h.b16 %v687
        %v774 = vunpack.c.l.b16 %v688
        %v775 = vunpack.c.h.b16 %v688
        %v776 = vunpack.c.l.b16 %v689
        %v777 = vunpack.c.h.b16 %v689
        %v778 = vunpack.c.l.b16 %v690
        %v779 = vunpack.c.h.b16 %v690
        %v780 = vunpack.c.l.b16 %v691
        %v781 = vunpack.c.h.b16 %v691
        %v782 = vunpack.c.l.b16 %v692
        %v783 = vunpack.c.h.b16 %v692
        %v784 = vunpack.c.l.b16 %v693
        %v785 = vunpack.c.h.b16 %v693
        %v786 = vunpack.c.l.b16 %v694
        %v787 = vunpack.c.h.b16 %v694
        %v788 = vunpack.c.l.b16 %v695
        %v789 = vunpack.c.h.b16 %v695
        %v790 = vunpack.c.l.b16 %v696
        %v791 = vunpack.c.h.b16 %v696
        %v792 = vunpack.c.l.b16 %v697
        %v793 = vunpack.c.h.b16 %v697
        %v794 = vunpack.c.l.b16 %v698
        %v795 = vunpack.c.h.b16 %v698
        %v796 = vunpack.c.l.b16 %v699
        %v797 = vunpack.c.h.b16 %v699
        %v798 = vunpack.c.l.b16 %v700
        %v799 = vunpack.c.h.b16 %v700
        %v800 = vpack.c.b16 %v740, %v736
        %v801 = vpack.c.b16 %v741, %v737
        %v802 = vpack.c.b16 %v742, %v738
        %v803 = vpack.c.b16 %v743, %v739
        %v804 = vpack.c.b16 %v748, %v744
        %v805 = vpack.c.b16 %v749, %v745
        %v806 = vpack.c.b16 %v750, %v746
        %v807 = vpack.c.b16 %v751, %v747
        %v808 = vpack.c.b16 %v756, %v752
        %v809 = vpack.c.b16 %v757, %v753
        %v810 = vpack.c.b16 %v758, %v754
        %v811 = vpack.c.b16 %v759, %v755
        %v812 = vpack.c.b16 %v764, %v760
        %v813 = vpack.c.b16 %v765, %v761
        %v814 = vpack.c.b16 %v766, %v762
        %v815 = vpack.c.b16 %v767, %v763
        %v816 = vpack.c.b16 %v772, %v768
        %v817 = vpack.c.b16 %v773, %v769
        %v818 = vpack.c.b16 %v774, %v770
        %v819 = vpack.c.b16 %v775, %v771
        %v820 = vpack.c.b16 %v780, %v776
        %v821 = vpack.c.b16 %v781, %v777
        %v822 = vpack.c.b16 %v782, %v778
        %v823 = vpack.c.b16 %v783, %v779
        %v824 = vpack.c.b16 %v788, %v784
        %v825 = vpack.c.b16 %v789, %v785
        %v826 = vpack.c.b16 %v790, %v786
        %v827 = vpack.c.b16 %v791, %v787
        %v828 = vpack.c.b16 %v796, %v792
        %v829 = vpack.c.b16 %v797, %v793
        %v830 = vpack.c.b16 %v798, %v794
        %v831 = vpack.c.b16 %v799, %v795
        %864 = vmatprep.subr.bf16.mxu0 %v801
        %865 = vmatpush1.bf16.msra.mxu0 %v800
        %866 = vmatprep.subr.bf16.mxu0 %v805
        %867 = vmatpush1.bf16.msra.mxu0 %v804
        %868 = vmatprep.subr.bf16.mxu0 %v809
        %869 = vmatpush1.bf16.msra.mxu0 %v808
        %870 = vmatprep.subr.bf16.mxu0 %v813
        %871 = vmatpush1.bf16.msra.mxu0 %v812
        %872 = vmatprep.subr.bf16.mxu0 %v817
        %873 = vmatpush1.bf16.msra.mxu0 %v816
        %874 = vmatprep.subr.bf16.mxu0 %v821
        %875 = vmatpush1.bf16.msra.mxu0 %v820
        %876 = vmatprep.subr.bf16.mxu0 %v825
        %877 = vmatpush1.bf16.msra.mxu0 %v824
        %878 = vmatprep.subr.bf16.mxu0 %v829
        %879 = vmatpush1.bf16.msra.mxu0 %v828
        %880 = vmatprep.subr.bf16.mxu0 0
        %881 = vmatpush1.bf16.msra.mxu0 0
        %882 = vmatprep.subr.bf16.mxu0 0
        %883 = vmatpush1.bf16.msra.mxu0 0
        %884 = vmatprep.subr.bf16.mxu0 0
        %885 = vmatpush1.bf16.msra.mxu0 0
        %886 = vmatprep.subr.bf16.mxu0 0
        %887 = vmatpush1.bf16.msra.mxu0 0
        %888 = vmatprep.subr.bf16.mxu0 0
        %889 = vmatpush1.bf16.msra.mxu0 0
        %890 = vmatprep.subr.bf16.mxu0 0
        %891 = vmatpush1.bf16.msra.mxu0 0
        %892 = vmatprep.subr.bf16.mxu0 0
        %893 = vmatpush1.bf16.msra.mxu0 0
        %894 = vmatprep.subr.bf16.mxu0 0
        %895 = vmatpush1.bf16.msra.mxu0 0
        %896 = vmatprep.mubr.bf16.mxu0 0
        %897 = vmatmul.mubr.bf16.gmra.mrb[0].mxu0 %v350
        %v898 = vpop.f32.mrb[0].mxu0
        %v899 = vadd.f32 %v703, %v898
        %v900 = vpop.f32.mrb[0].mxu0
        %v901 = vadd.f32 %v703, %v900
        %v902 = vpop.f32.mrb[0].mxu0
        %v903 = vadd.f32 %v703, %v902
        %v904 = vpop.f32.mrb[0].mxu0
        %v905 = vadd.f32 %v703, %v904
        %906 = vmatprep.mubr.bf16.mxu0 0
        %907 = vmatmul.mubr.bf16.gmra.mrb[0].mxu0 %v351
        %v908 = vpop.f32.mrb[0].mxu0
        %v909 = vadd.f32 %v703, %v908
        %v910 = vpop.f32.mrb[0].mxu0
        %v911 = vadd.f32 %v703, %v910
        %v912 = vpop.f32.mrb[0].mxu0
        %v913 = vadd.f32 %v703, %v912
        %v914 = vpop.f32.mrb[0].mxu0
        %v915 = vadd.f32 %v703, %v914
        %916 = vdwg.mxu0
        %917 = vmatprep.subr.bf16.mxu0 %v803
        %918 = vmatpush1.bf16.msra.mxu0 %v802
        %919 = vmatprep.subr.bf16.mxu0 %v807
        %920 = vmatpush1.bf16.msra.mxu0 %v806
        %921 = vmatprep.subr.bf16.mxu0 %v811
        %922 = vmatpush1.bf16.msra.mxu0 %v810
        %923 = vmatprep.subr.bf16.mxu0 %v815
        %924 = vmatpush1.bf16.msra.mxu0 %v814
        %925 = vmatprep.subr.bf16.mxu0 %v819
        %926 = vmatpush1.bf16.msra.mxu0 %v818
        %927 = vmatprep.subr.bf16.mxu0 %v823
        %928 = vmatpush1.bf16.msra.mxu0 %v822
        %929 = vmatprep.subr.bf16.mxu0 %v827
        %930 = vmatpush1.bf16.msra.mxu0 %v826
        %931 = vmatprep.subr.bf16.mxu0 %v831
        %932 = vmatpush1.bf16.msra.mxu0 %v830
        %933 = vmatprep.subr.bf16.mxu0 0
        %934 = vmatpush1.bf16.msra.mxu0 0
        %935 = vmatprep.subr.bf16.mxu0 0
        %936 = vmatpush1.bf16.msra.mxu0 0
        %937 = vmatprep.subr.bf16.mxu0 0
        %938 = vmatpush1.bf16.msra.mxu0 0
        %939 = vmatprep.subr.bf16.mxu0 0
        %940 = vmatpush1.bf16.msra.mxu0 0
        %941 = vmatprep.subr.bf16.mxu0 0
        %942 = vmatpush1.bf16.msra.mxu0 0
        %943 = vmatprep.subr.bf16.mxu0 0
        %944 = vmatpush1.bf16.msra.mxu0 0
        %945 = vmatprep.subr.bf16.mxu0 0
        %946 = vmatpush1.bf16.msra.mxu0 0
        %947 = vmatprep.subr.bf16.mxu0 0
        %948 = vmatpush1.bf16.msra.mxu0 0
        %949 = vmatprep.mubr.bf16.mxu0 0
        %950 = vmatmul.mubr.bf16.gmra.mrb[0].mxu0 %v350
        %v951 = vpop.f32.mrb[0].mxu0
        %v952 = vadd.f32 %v703, %v951
        %v953 = vpop.f32.mrb[0].mxu0
        %v954 = vadd.f32 %v703, %v953
        %v955 = vpop.f32.mrb[0].mxu0
        %v956 = vadd.f32 %v703, %v955
        %v957 = vpop.f32.mrb[0].mxu0
        %v958 = vadd.f32 %v703, %v957
        %959 = vmatprep.mubr.bf16.mxu0 0
        %960 = vmatmul.mubr.bf16.gmra.mrb[0].mxu0 %v351
        %v961 = vpop.f32.mrb[0].mxu0
        %v962 = vadd.f32 %v703, %v961
        %v963 = vpop.f32.mrb[0].mxu0
        %v964 = vadd.f32 %v703, %v963
        %v965 = vpop.f32.mrb[0].mxu0
        %v966 = vadd.f32 %v703, %v965
        %v967 = vpop.f32.mrb[0].mxu0
        %v968 = vadd.f32 %v703, %v967
        %969 = vdwg.mxu0
        %v970 = vmax.f32 %v899, 0.0
        %v971 = vmax.f32 %v901, 0.0
        %v972 = vmax.f32 %v952, 0.0
        %v973 = vmax.f32 %v954, 0.0
        %v974 = vmax.f32 %v903, 0.0
        %v975 = vmax.f32 %v905, 0.0
        %v976 = vmax.f32 %v956, 0.0
        %v977 = vmax.f32 %v958, 0.0
        %v978 = vmax.f32 %v909, 0.0
        %v979 = vmax.f32 %v911, 0.0
        %v980 = vmax.f32 %v962, 0.0
        %v981 = vmax.f32 %v964, 0.0
        %v982 = vmax.f32 %v913, 0.0
        %v983 = vmax.f32 %v915, 0.0
        %v984 = vmax.f32 %v966, 0.0
        %v985 = vmax.f32 %v968, 0.0
        %v986 = vmin.f32 %v970, 6.0
        %v987 = vmin.f32 %v971, 6.0
        %v988 = vmin.f32 %v972, 6.0
        %v989 = vmin.f32 %v973, 6.0
        %v990 = vmin.f32 %v974, 6.0
        %v991 = vmin.f32 %v975, 6.0
        %v992 = vmin.f32 %v976, 6.0
        %v993 = vmin.f32 %v977, 6.0
        %v994 = vmin.f32 %v978, 6.0
        %v995 = vmin.f32 %v979, 6.0
        %v996 = vmin.f32 %v980, 6.0
        %v997 = vmin.f32 %v981, 6.0
        %v998 = vmin.f32 %v982, 6.0
        %v999 = vmin.f32 %v983, 6.0
        %v1000 = vmin.f32 %v984, 6.0
        %v1001 = vmin.f32 %v985, 6.0
        %v1002 = vstv %s701
        %v1003 = vmul.f32 %v1002, %v986
        %v1004 = vmul.f32 %v1002, %v987
        %v1005 = vmul.f32 %v1002, %v988
        %v1006 = vmul.f32 %v1002, %v989
        %v1007 = vmul.f32 %v1002, %v990
        %v1008 = vmul.f32 %v1002, %v991
        %v1009 = vmul.f32 %v1002, %v992
        %v1010 = vmul.f32 %v1002, %v993
        %v1011 = vmul.f32 %v1002, %v994
        %v1012 = vmul.f32 %v1002, %v995
        %v1013 = vmul.f32 %v1002, %v996
        %v1014 = vmul.f32 %v1002, %v997
        %v1015 = vmul.f32 %v1002, %v998
        %v1016 = vmul.f32 %v1002, %v999
        %v1017 = vmul.f32 %v1002, %v1000
        %v1018 = vmul.f32 %v1002, %v1001
        %v1019 = vadd.f32 %v653, %v1003
        %v1020 = vadd.f32 %v654, %v1004
        %v1021 = vadd.f32 %v655, %v1005
        %v1022 = vadd.f32 %v656, %v1006
        %v1023 = vadd.f32 %v657, %v1007
        %v1024 = vadd.f32 %v658, %v1008
        %v1025 = vadd.f32 %v659, %v1009
        %v1026 = vadd.f32 %v660, %v1010
        %v1027 = vadd.f32 %v661, %v1011
        %v1028 = vadd.f32 %v662, %v1012
        %v1029 = vadd.f32 %v663, %v1013
        %v1030 = vadd.f32 %v664, %v1014
        %v1031 = vadd.f32 %v665, %v1015
        %v1032 = vadd.f32 %v666, %v1016
        %v1033 = vadd.f32 %v667, %v1017
        %v1034 = vadd.f32 %v668, %v1018
        %v1035 = vld [vmem:[%s253 + $0x20] sm:$0xff]
        %v1036 = vld [vmem:[%s253 + $0x28] sm:$0xff]
        %v1037 = vld [vmem:[%s253 + $0x60] sm:$0xff]
        %v1038 = vld [vmem:[%s253 + $0x68] sm:$0xff]
        %v1039 = vld [vmem:[%s253 + $0xa0] sm:$0xff]
        %v1040 = vld [vmem:[%s253 + $0xa8] sm:$0xff]
        %v1041 = vld [vmem:[%s253 + $0xe0] sm:$0xff]
        %v1042 = vld [vmem:[%s253 + $0xe8] sm:$0xff]
        %v1043 = vld [vmem:[%s253 + $0x120] sm:$0xff]
        %v1044 = vld [vmem:[%s253 + $0x128] sm:$0xff]
        %v1045 = vld [vmem:[%s253 + $0x160] sm:$0xff]
        %v1046 = vld [vmem:[%s253 + $0x168] sm:$0xff]
        %v1047 = vld [vmem:[%s253 + $0x1a0] sm:$0xff]
        %v1048 = vld [vmem:[%s253 + $0x1a8] sm:$0xff]
        %v1049 = vld [vmem:[%s253 + $0x1e0] sm:$0xff]
        %v1050 = vld [vmem:[%s253 + $0x1e8] sm:$0xff]
        %v1051 = vld [vmem:[%s253 + $0x220] sm:$0xff]
        %v1052 = vld [vmem:[%s253 + $0x228] sm:$0xff]
        %v1053 = vld [vmem:[%s253 + $0x260] sm:$0xff]
        %v1054 = vld [vmem:[%s253 + $0x268] sm:$0xff]
        %v1055 = vld [vmem:[%s253 + $0x2a0] sm:$0xff]
        %v1056 = vld [vmem:[%s253 + $0x2a8] sm:$0xff]
        %v1057 = vld [vmem:[%s253 + $0x2e0] sm:$0xff]
        %v1058 = vld [vmem:[%s253 + $0x2e8] sm:$0xff]
        %v1059 = vld [vmem:[%s253 + $0x320] sm:$0xff]
        %v1060 = vld [vmem:[%s253 + $0x328] sm:$0xff]
        %v1061 = vld [vmem:[%s253 + $0x360] sm:$0xff]
        %v1062 = vld [vmem:[%s253 + $0x368] sm:$0xff]
        %v1063 = vld [vmem:[%s253 + $0x3a0] sm:$0xff]
        %v1064 = vld [vmem:[%s253 + $0x3a8] sm:$0xff]
        %v1065 = vld [vmem:[%s253 + $0x3e0] sm:$0xff]
        %v1066 = vld [vmem:[%s253 + $0x3e8] sm:$0xff]
        %s1067 = sld [smem:[#allocation7 + $0x2]]
        %s1068 = sld [smem:[#allocation6 + $0x2]]
        %v1069 = vstv %s1068
        %v1102 = vunpack.c.l.b16 %v1035
        %v1103 = vunpack.c.h.b16 %v1035
        %v1104 = vunpack.c.l.b16 %v1036
        %v1105 = vunpack.c.h.b16 %v1036
        %v1106 = vunpack.c.l.b16 %v1037
        %v1107 = vunpack.c.h.b16 %v1037
        %v1108 = vunpack.c.l.b16 %v1038
        %v1109 = vunpack.c.h.b16 %v1038
        %v1110 = vunpack.c.l.b16 %v1039
        %v1111 = vunpack.c.h.b16 %v1039
        %v1112 = vunpack.c.l.b16 %v1040
        %v1113 = vunpack.c.h.b16 %v1040
        %v1114 = vunpack.c.l.b16 %v1041
        %v1115 = vunpack.c.h.b16 %v1041
        %v1116 = vunpack.c.l.b16 %v1042
        %v1117 = vunpack.c.h.b16 %v1042
        %v1118 = vunpack.c.l.b16 %v1043
        %v1119 = vunpack.c.h.b16 %v1043
        %v1120 = vunpack.c.l.b16 %v1044
        %v1121 = vunpack.c.h.b16 %v1044
        %v1122 = vunpack.c.l.b16 %v1045
        %v1123 = vunpack.c.h.b16 %v1045
        %v1124 = vunpack.c.l.b16 %v1046
        %v1125 = vunpack.c.h.b16 %v1046
        %v1126 = vunpack.c.l.b16 %v1047
        %v1127 = vunpack.c.h.b16 %v1047
        %v1128 = vunpack.c.l.b16 %v1048
        %v1129 = vunpack.c.h.b16 %v1048
        %v1130 = vunpack.c.l.b16 %v1049
        %v1131 = vunpack.c.h.b16 %v1049
        %v1132 = vunpack.c.l.b16 %v1050
        %v1133 = vunpack.c.h.b16 %v1050
        %v1134 = vunpack.c.l.b16 %v1051
        %v1135 = vunpack.c.h.b16 %v1051
        %v1136 = vunpack.c.l.b16 %v1052
        %v1137 = vunpack.c.h.b16 %v1052
        %v1138 = vunpack.c.l.b16 %v1053
        %v1139 = vunpack.c.h.b16 %v1053
        %v1140 = vunpack.c.l.b16 %v1054
        %v1141 = vunpack.c.h.b16 %v1054
        %v1142 = vunpack.c.l.b16 %v1055
        %v1143 = vunpack.c.h.b16 %v1055
        %v1144 = vunpack.c.l.b16 %v1056
        %v1145 = vunpack.c.h.b16 %v1056
        %v1146 = vunpack.c.l.b16 %v1057
        %v1147 = vunpack.c.h.b16 %v1057
        %v1148 = vunpack.c.l.b16 %v1058
        %v1149 = vunpack.c.h.b16 %v1058
        %v1150 = vunpack.c.l.b16 %v1059
        %v1151 = vunpack.c.h.b16 %v1059
        %v1152 = vunpack.c.l.b16 %v1060
        %v1153 = vunpack.c.h.b16 %v1060
        %v1154 = vunpack.c.l.b16 %v1061
        %v1155 = vunpack.c.h.b16 %v1061
        %v1156 = vunpack.c.l.b16 %v1062
        %v1157 = vunpack.c.h.b16 %v1062
        %v1158 = vunpack.c.l.b16 %v1063
        %v1159 = vunpack.c.h.b16 %v1063
        %v1160 = vunpack.c.l.b16 %v1064
        %v1161 = vunpack.c.h.b16 %v1064
        %v1162 = vunpack.c.l.b16 %v1065
        %v1163 = vunpack.c.h.b16 %v1065
        %v1164 = vunpack.c.l.b16 %v1066
        %v1165 = vunpack.c.h.b16 %v1066
        %v1166 = vpack.c.b16 %v1106, %v1102
        %v1167 = vpack.c.b16 %v1107, %v1103
        %v1168 = vpack.c.b16 %v1108, %v1104
        %v1169 = vpack.c.b16 %v1109, %v1105
        %v1170 = vpack.c.b16 %v1114, %v1110
        %v1171 = vpack.c.b16 %v1115, %v1111
        %v1172 = vpack.c.b16 %v1116, %v1112
        %v1173 = vpack.c.b16 %v1117, %v1113
        %v1174 = vpack.c.b16 %v1122, %v1118
        %v1175 = vpack.c.b16 %v1123, %v1119
        %v1176 = vpack.c.b16 %v1124, %v1120
        %v1177 = vpack.c.b16 %v1125, %v1121
        %v1178 = vpack.c.b16 %v1130, %v1126
        %v1179 = vpack.c.b16 %v1131, %v1127
        %v1180 = vpack.c.b16 %v1132, %v1128
        %v1181 = vpack.c.b16 %v1133, %v1129
        %v1182 = vpack.c.b16 %v1138, %v1134
        %v1183 = vpack.c.b16 %v1139, %v1135
        %v1184 = vpack.c.b16 %v1140, %v1136
        %v1185 = vpack.c.b16 %v1141, %v1137
        %v1186 = vpack.c.b16 %v1146, %v1142
        %v1187 = vpack.c.b16 %v1147, %v1143
        %v1188 = vpack.c.b16 %v1148, %v1144
        %v1189 = vpack.c.b16 %v1149, %v1145
        %v1190 = vpack.c.b16 %v1154, %v1150
        %v1191 = vpack.c.b16 %v1155, %v1151
        %v1192 = vpack.c.b16 %v1156, %v1152
        %v1193 = vpack.c.b16 %v1157, %v1153
        %v1194 = vpack.c.b16 %v1162, %v1158
        %v1195 = vpack.c.b16 %v1163, %v1159
        %v1196 = vpack.c.b16 %v1164, %v1160
        %v1197 = vpack.c.b16 %v1165, %v1161
        %1230 = vmatprep.subr.bf16.mxu0 %v1167
        %1231 = vmatpush1.bf16.msra.mxu0 %v1166
        %1232 = vmatprep.subr.bf16.mxu0 %v1171
        %1233 = vmatpush1.bf16.msra.mxu0 %v1170
        %1234 = vmatprep.subr.bf16.mxu0 %v1175
        %1235 = vmatpush1.bf16.msra.mxu0 %v1174
        %1236 = vmatprep.subr.bf16.mxu0 %v1179
        %1237 = vmatpush1.bf16.msra.mxu0 %v1178
        %1238 = vmatprep.subr.bf16.mxu0 %v1183
        %1239 = vmatpush1.bf16.msra.mxu0 %v1182
        %1240 = vmatprep.subr.bf16.mxu0 %v1187
        %1241 = vmatpush1.bf16.msra.mxu0 %v1186
        %1242 = vmatprep.subr.bf16.mxu0 %v1191
        %1243 = vmatpush1.bf16.msra.mxu0 %v1190
        %1244 = vmatprep.subr.bf16.mxu0 %v1195
        %1245 = vmatpush1.bf16.msra.mxu0 %v1194
        %1246 = vmatprep.subr.bf16.mxu0 0
        %1247 = vmatpush1.bf16.msra.mxu0 0
        %1248 = vmatprep.subr.bf16.mxu0 0
        %1249 = vmatpush1.bf16.msra.mxu0 0
        %1250 = vmatprep.subr.bf16.mxu0 0
        %1251 = vmatpush1.bf16.msra.mxu0 0
        %1252 = vmatprep.subr.bf16.mxu0 0
        %1253 = vmatpush1.bf16.msra.mxu0 0
        %1254 = vmatprep.subr.bf16.mxu0 0
        %1255 = vmatpush1.bf16.msra.mxu0 0
        %1256 = vmatprep.subr.bf16.mxu0 0
        %1257 = vmatpush1.bf16.msra.mxu0 0
        %1258 = vmatprep.subr.bf16.mxu0 0
        %1259 = vmatpush1.bf16.msra.mxu0 0
        %1260 = vmatprep.subr.bf16.mxu0 0
        %1261 = vmatpush1.bf16.msra.mxu0 0
        %1262 = vmatprep.mubr.bf16.mxu0 0
        %1263 = vmatmul.mubr.bf16.gmra.mrb[0].mxu0 %v350
        %v1264 = vpop.f32.mrb[0].mxu0
        %v1265 = vadd.f32 %v1069, %v1264
        %v1266 = vpop.f32.mrb[0].mxu0
        %v1267 = vadd.f32 %v1069, %v1266
        %v1268 = vpop.f32.mrb[0].mxu0
        %v1269 = vadd.f32 %v1069, %v1268
        %v1270 = vpop.f32.mrb[0].mxu0
        %v1271 = vadd.f32 %v1069, %v1270
        %1272 = vmatprep.mubr.bf16.mxu0 0
        %1273 = vmatmul.mubr.bf16.gmra.mrb[0].mxu0 %v351
        %v1274 = vpop.f32.mrb[0].mxu0
        %v1275 = vadd.f32 %v1069, %v1274
        %v1276 = vpop.f32.mrb[0].mxu0
        %v1277 = vadd.f32 %v1069, %v1276
        %v1278 = vpop.f32.mrb[0].mxu0
        %v1279 = vadd.f32 %v1069, %v1278
        %v1280 = vpop.f32.mrb[0].mxu0
        %v1281 = vadd.f32 %v1069, %v1280
        %1282 = vdwg.mxu0
        %1283 = vmatprep.subr.bf16.mxu0 %v1169
        %1284 = vmatpush1.bf16.msra.mxu0 %v1168
        %1285 = vmatprep.subr.bf16.mxu0 %v1173
        %1286 = vmatpush1.bf16.msra.mxu0 %v1172
        %1287 = vmatprep.subr.bf16.mxu0 %v1177
        %1288 = vmatpush1.bf16.msra.mxu0 %v1176
        %1289 = vmatprep.subr.bf16.mxu0 %v1181
        %1290 = vmatpush1.bf16.msra.mxu0 %v1180
        %1291 = vmatprep.subr.bf16.mxu0 %v1185
        %1292 = vmatpush1.bf16.msra.mxu0 %v1184
        %1293 = vmatprep.subr.bf16.mxu0 %v1189
        %1294 = vmatpush1.bf16.msra.mxu0 %v1188
        %1295 = vmatprep.subr.bf16.mxu0 %v1193
        %1296 = vmatpush1.bf16.msra.mxu0 %v1192
        %1297 = vmatprep.subr.bf16.mxu0 %v1197
        %1298 = vmatpush1.bf16.msra.mxu0 %v1196
        %1299 = vmatprep.subr.bf16.mxu0 0
        %1300 = vmatpush1.bf16.msra.mxu0 0
        %1301 = vmatprep.subr.bf16.mxu0 0
        %1302 = vmatpush1.bf16.msra.mxu0 0
        %1303 = vmatprep.subr.bf16.mxu0 0
        %1304 = vmatpush1.bf16.msra.mxu0 0
        %1305 = vmatprep.subr.bf16.mxu0 0
        %1306 = vmatpush1.bf16.msra.mxu0 0
        %1307 = vmatprep.subr.bf16.mxu0 0
        %1308 = vmatpush1.bf16.msra.mxu0 0
        %1309 = vmatprep.subr.bf16.mxu0 0
        %1310 = vmatpush1.bf16.msra.mxu0 0
        %1311 = vmatprep.subr.bf16.mxu0 0
        %1312 = vmatpush1.bf16.msra.mxu0 0
        %1313 = vmatprep.subr.bf16.mxu0 0
        %1314 = vmatpush1.bf16.msra.mxu0 0
        %1315 = vmatprep.mubr.bf16.mxu0 0
        %1316 = vmatmul.mubr.bf16.gmra.mrb[0].mxu0 %v350
        %v1317 = vpop.f32.mrb[0].mxu0
        %v1318 = vadd.f32 %v1069, %v1317
        %v1319 = vpop.f32.mrb[0].mxu0
        %v1320 = vadd.f32 %v1069, %v1319
        %v1321 = vpop.f32.mrb[0].mxu0
        %v1322 = vadd.f32 %v1069, %v1321
        %v1323 = vpop.f32.mrb[0].mxu0
        %v1324 = vadd.f32 %v1069, %v1323
        %1325 = vmatprep.mubr.bf16.mxu0 0
        %1326 = vmatmul.mubr.bf16.gmra.mrb[0].mxu0 %v351
        %v1327 = vpop.f32.mrb[0].mxu0
        %v1328 = vadd.f32 %v1069, %v1327
        %v1329 = vpop.f32.mrb[0].mxu0
        %v1330 = vadd.f32 %v1069, %v1329
        %v1331 = vpop.f32.mrb[0].mxu0
        %v1332 = vadd.f32 %v1069, %v1331
        %v1333 = vpop.f32.mrb[0].mxu0
        %v1334 = vadd.f32 %v1069, %v1333
        %1335 = vdwg.mxu0
        %v1336 = vmax.f32 %v1265, 0.0
        %v1337 = vmax.f32 %v1267, 0.0
        %v1338 = vmax.f32 %v1318, 0.0
        %v1339 = vmax.f32 %v1320, 0.0
        %v1340 = vmax.f32 %v1269, 0.0
        %v1341 = vmax.f32 %v1271, 0.0
        %v1342 = vmax.f32 %v1322, 0.0
        %v1343 = vmax.f32 %v1324, 0.0
        %v1344 = vmax.f32 %v1275, 0.0
        %v1345 = vmax.f32 %v1277, 0.0
        %v1346 = vmax.f32 %v1328, 0.0
        %v1347 = vmax.f32 %v1330, 0.0
        %v1348 = vmax.f32 %v1279, 0.0
        %v1349 = vmax.f32 %v1281, 0.0
        %v1350 = vmax.f32 %v1332, 0.0
        %v1351 = vmax.f32 %v1334, 0.0
        %v1352 = vmin.f32 %v1336, 6.0
        %v1353 = vmin.f32 %v1337, 6.0
        %v1354 = vmin.f32 %v1338, 6.0
        %v1355 = vmin.f32 %v1339, 6.0
        %v1356 = vmin.f32 %v1340, 6.0
        %v1357 = vmin.f32 %v1341, 6.0
        %v1358 = vmin.f32 %v1342, 6.0
        %v1359 = vmin.f32 %v1343, 6.0
        %v1360 = vmin.f32 %v1344, 6.0
        %v1361 = vmin.f32 %v1345, 6.0
        %v1362 = vmin.f32 %v1346, 6.0
        %v1363 = vmin.f32 %v1347, 6.0
        %v1364 = vmin.f32 %v1348, 6.0
        %v1365 = vmin.f32 %v1349, 6.0
        %v1366 = vmin.f32 %v1350, 6.0
        %v1367 = vmin.f32 %v1351, 6.0
        %v1368 = vstv %s1067
        %v1369 = vmul.f32 %v1368, %v1352
        %v1370 = vmul.f32 %v1368, %v1353
        %v1371 = vmul.f32 %v1368, %v1354
        %v1372 = vmul.f32 %v1368, %v1355
        %v1373 = vmul.f32 %v1368, %v1356
        %v1374 = vmul.f32 %v1368, %v1357
        %v1375 = vmul.f32 %v1368, %v1358
        %v1376 = vmul.f32 %v1368, %v1359
        %v1377 = vmul.f32 %v1368, %v1360
        %v1378 = vmul.f32 %v1368, %v1361
        %v1379 = vmul.f32 %v1368, %v1362
        %v1380 = vmul.f32 %v1368, %v1363
        %v1381 = vmul.f32 %v1368, %v1364
        %v1382 = vmul.f32 %v1368, %v1365
        %v1383 = vmul.f32 %v1368, %v1366
        %v1384 = vmul.f32 %v1368, %v1367
        %v1385 = vadd.f32 %v1019, %v1369
        %v1386 = vadd.f32 %v1020, %v1370
        %v1387 = vadd.f32 %v1021, %v1371
        %v1388 = vadd.f32 %v1022, %v1372
        %v1389 = vadd.f32 %v1023, %v1373
        %v1390 = vadd.f32 %v1024, %v1374
        %v1391 = vadd.f32 %v1025, %v1375
        %v1392 = vadd.f32 %v1026, %v1376
        %v1393 = vadd.f32 %v1027, %v1377
        %v1394 = vadd.f32 %v1028, %v1378
        %v1395 = vadd.f32 %v1029, %v1379
        %v1396 = vadd.f32 %v1030, %v1380
        %v1397 = vadd.f32 %v1031, %v1381
        %v1398 = vadd.f32 %v1032, %v1382
        %v1399 = vadd.f32 %v1033, %v1383
        %v1400 = vadd.f32 %v1034, %v1384
        %v1401 = vld [vmem:[%s253 + $0x30] sm:$0xff]
        %v1402 = vld [vmem:[%s253 + $0x38] sm:$0xff]
        %v1403 = vld [vmem:[%s253 + $0x70] sm:$0xff]
        %v1404 = vld [vmem:[%s253 + $0x78] sm:$0xff]
        %v1405 = vld [vmem:[%s253 + $0xb0] sm:$0xff]
        %v1406 = vld [vmem:[%s253 + $0xb8] sm:$0xff]
        %v1407 = vld [vmem:[%s253 + $0xf0] sm:$0xff]
        %v1408 = vld [vmem:[%s253 + $0xf8] sm:$0xff]
        %v1409 = vld [vmem:[%s253 + $0x130] sm:$0xff]
        %v1410 = vld [vmem:[%s253 + $0x138] sm:$0xff]
        %v1411 = vld [vmem:[%s253 + $0x170] sm:$0xff]
        %v1412 = vld [vmem:[%s253 + $0x178] sm:$0xff]
        %v1413 = vld [vmem:[%s253 + $0x1b0] sm:$0xff]
        %v1414 = vld [vmem:[%s253 + $0x1b8] sm:$0xff]
        %v1415 = vld [vmem:[%s253 + $0x1f0] sm:$0xff]
        %v1416 = vld [vmem:[%s253 + $0x1f8] sm:$0xff]
        %v1417 = vld [vmem:[%s253 + $0x230] sm:$0xff]
        %v1418 = vld [vmem:[%s253 + $0x238] sm:$0xff]
        %v1419 = vld [vmem:[%s253 + $0x270] sm:$0xff]
        %v1420 = vld [vmem:[%s253 + $0x278] sm:$0xff]
        %v1421 = vld [vmem:[%s253 + $0x2b0] sm:$0xff]
        %v1422 = vld [vmem:[%s253 + $0x2b8] sm:$0xff]
        %v1423 = vld [vmem:[%s253 + $0x2f0] sm:$0xff]
        %v1424 = vld [vmem:[%s253 + $0x2f8] sm:$0xff]
        %v1425 = vld [vmem:[%s253 + $0x330] sm:$0xff]
        %v1426 = vld [vmem:[%s253 + $0x338] sm:$0xff]
        %v1427 = vld [vmem:[%s253 + $0x370] sm:$0xff]
        %v1428 = vld [vmem:[%s253 + $0x378] sm:$0xff]
        %v1429 = vld [vmem:[%s253 + $0x3b0] sm:$0xff]
        %v1430 = vld [vmem:[%s253 + $0x3b8] sm:$0xff]
        %v1431 = vld [vmem:[%s253 + $0x3f0] sm:$0xff]
        %v1432 = vld [vmem:[%s253 + $0x3f8] sm:$0xff]
        %s1433 = sld [smem:[#allocation7 + $0x3]]
        %s1434 = sld [smem:[#allocation6 + $0x3]]
        %v1435 = vstv %s1434
        %v1468 = vunpack.c.l.b16 %v1401
        %v1469 = vunpack.c.h.b16 %v1401
        %v1470 = vunpack.c.l.b16 %v1402
        %v1471 = vunpack.c.h.b16 %v1402
        %v1472 = vunpack.c.l.b16 %v1403
        %v1473 = vunpack.c.h.b16 %v1403
        %v1474 = vunpack.c.l.b16 %v1404
        %v1475 = vunpack.c.h.b16 %v1404
        %v1476 = vunpack.c.l.b16 %v1405
        %v1477 = vunpack.c.h.b16 %v1405
        %v1478 = vunpack.c.l.b16 %v1406
        %v1479 = vunpack.c.h.b16 %v1406
        %v1480 = vunpack.c.l.b16 %v1407
        %v1481 = vunpack.c.h.b16 %v1407
        %v1482 = vunpack.c.l.b16 %v1408
        %v1483 = vunpack.c.h.b16 %v1408
        %v1484 = vunpack.c.l.b16 %v1409
        %v1485 = vunpack.c.h.b16 %v1409
        %v1486 = vunpack.c.l.b16 %v1410
        %v1487 = vunpack.c.h.b16 %v1410
        %v1488 = vunpack.c.l.b16 %v1411
        %v1489 = vunpack.c.h.b16 %v1411
        %v1490 = vunpack.c.l.b16 %v1412
        %v1491 = vunpack.c.h.b16 %v1412
        %v1492 = vunpack.c.l.b16 %v1413
        %v1493 = vunpack.c.h.b16 %v1413
        %v1494 = vunpack.c.l.b16 %v1414
        %v1495 = vunpack.c.h.b16 %v1414
        %v1496 = vunpack.c.l.b16 %v1415
        %v1497 = vunpack.c.h.b16 %v1415
        %v1498 = vunpack.c.l.b16 %v1416
        %v1499 = vunpack.c.h.b16 %v1416
        %v1500 = vunpack.c.l.b16 %v1417
        %v1501 = vunpack.c.h.b16 %v1417
        %v1502 = vunpack.c.l.b16 %v1418
        %v1503 = vunpack.c.h.b16 %v1418
        %v1504 = vunpack.c.l.b16 %v1419
        %v1505 = vunpack.c.h.b16 %v1419
        %v1506 = vunpack.c.l.b16 %v1420
        %v1507 = vunpack.c.h.b16 %v1420
        %v1508 = vunpack.c.l.b16 %v1421
        %v1509 = vunpack.c.h.b16 %v1421
        %v1510 = vunpack.c.l.b16 %v1422
        %v1511 = vunpack.c.h.b16 %v1422
        %v1512 = vunpack.c.l.b16 %v1423
        %v1513 = vunpack.c.h.b16 %v1423
        %v1514 = vunpack.c.l.b16 %v1424
        %v1515 = vunpack.c.h.b16 %v1424
        %v1516 = vunpack.c.l.b16 %v1425
        %v1517 = vunpack.c.h.b16 %v1425
        %v1518 = vunpack.c.l.b16 %v1426
        %v1519 = vunpack.c.h.b16 %v1426
        %v1520 = vunpack.c.l.b16 %v1427
        %v1521 = vunpack.c.h.b16 %v1427
        %v1522 = vunpack.c.l.b16 %v1428
        %v1523 = vunpack.c.h.b16 %v1428
        %v1524 = vunpack.c.l.b16 %v1429
        %v1525 = vunpack.c.h.b16 %v1429
        %v1526 = vunpack.c.l.b16 %v1430
        %v1527 = vunpack.c.h.b16 %v1430
        %v1528 = vunpack.c.l.b16 %v1431
        %v1529 = vunpack.c.h.b16 %v1431
        %v1530 = vunpack.c.l.b16 %v1432
        %v1531 = vunpack.c.h.b16 %v1432
        %v1532 = vpack.c.b16 %v1472, %v1468
        %v1533 = vpack.c.b16 %v1473, %v1469
        %v1534 = vpack.c.b16 %v1474, %v1470
        %v1535 = vpack.c.b16 %v1475, %v1471
        %v1536 = vpack.c.b16 %v1480, %v1476
        %v1537 = vpack.c.b16 %v1481, %v1477
        %v1538 = vpack.c.b16 %v1482, %v1478
        %v1539 = vpack.c.b16 %v1483, %v1479
        %v1540 = vpack.c.b16 %v1488, %v1484
        %v1541 = vpack.c.b16 %v1489, %v1485
        %v1542 = vpack.c.b16 %v1490, %v1486
        %v1543 = vpack.c.b16 %v1491, %v1487
        %v1544 = vpack.c.b16 %v1496, %v1492
        %v1545 = vpack.c.b16 %v1497, %v1493
        %v1546 = vpack.c.b16 %v1498, %v1494
        %v1547 = vpack.c.b16 %v1499, %v1495
        %v1548 = vpack.c.b16 %v1504, %v1500
        %v1549 = vpack.c.b16 %v1505, %v1501
        %v1550 = vpack.c.b16 %v1506, %v1502
        %v1551 = vpack.c.b16 %v1507, %v1503
        %v1552 = vpack.c.b16 %v1512, %v1508
        %v1553 = vpack.c.b16 %v1513, %v1509
        %v1554 = vpack.c.b16 %v1514, %v1510
        %v1555 = vpack.c.b16 %v1515, %v1511
        %v1556 = vpack.c.b16 %v1520, %v1516
        %v1557 = vpack.c.b16 %v1521, %v1517
        %v1558 = vpack.c.b16 %v1522, %v1518
        %v1559 = vpack.c.b16 %v1523, %v1519
        %v1560 = vpack.c.b16 %v1528, %v1524
        %v1561 = vpack.c.b16 %v1529, %v1525
        %v1562 = vpack.c.b16 %v1530, %v1526
        %v1563 = vpack.c.b16 %v1531, %v1527
        %1596 = vmatprep.subr.bf16.mxu0 %v1533
        %1597 = vmatpush1.bf16.msra.mxu0 %v1532
        %1598 = vmatprep.subr.bf16.mxu0 %v1537
        %1599 = vmatpush1.bf16.msra.mxu0 %v1536
        %1600 = vmatprep.subr.bf16.mxu0 %v1541
        %1601 = vmatpush1.bf16.msra.mxu0 %v1540
        %1602 = vmatprep.subr.bf16.mxu0 %v1545
        %1603 = vmatpush1.bf16.msra.mxu0 %v1544
        %1604 = vmatprep.subr.bf16.mxu0 %v1549
        %1605 = vmatpush1.bf16.msra.mxu0 %v1548
        %1606 = vmatprep.subr.bf16.mxu0 %v1553
        %1607 = vmatpush1.bf16.msra.mxu0 %v1552
        %1608 = vmatprep.subr.bf16.mxu0 %v1557
        %1609 = vmatpush1.bf16.msra.mxu0 %v1556
        %1610 = vmatprep.subr.bf16.mxu0 %v1561
        %1611 = vmatpush1.bf16.msra.mxu0 %v1560
        %1612 = vmatprep.subr.bf16.mxu0 0
        %1613 = vmatpush1.bf16.msra.mxu0 0
        %1614 = vmatprep.subr.bf16.mxu0 0
        %1615 = vmatpush1.bf16.msra.mxu0 0
        %1616 = vmatprep.subr.bf16.mxu0 0
        %1617 = vmatpush1.bf16.msra.mxu0 0
        %1618 = vmatprep.subr.bf16.mxu0 0
        %1619 = vmatpush1.bf16.msra.mxu0 0
        %1620 = vmatprep.subr.bf16.mxu0 0
        %1621 = vmatpush1.bf16.msra.mxu0 0
        %1622 = vmatprep.subr.bf16.mxu0 0
        %1623 = vmatpush1.bf16.msra.mxu0 0
        %1624 = vmatprep.subr.bf16.mxu0 0
        %1625 = vmatpush1.bf16.msra.mxu0 0
        %1626 = vmatprep.subr.bf16.mxu0 0
        %1627 = vmatpush1.bf16.msra.mxu0 0
        %1628 = vmatprep.mubr.bf16.mxu0 0
        %1629 = vmatmul.mubr.bf16.gmra.mrb[0].mxu0 %v350
        %v1630 = vpop.f32.mrb[0].mxu0
        %v1631 = vadd.f32 %v1435, %v1630
        %v1632 = vpop.f32.mrb[0].mxu0
        %v1633 = vadd.f32 %v1435, %v1632
        %v1634 = vpop.f32.mrb[0].mxu0
        %v1635 = vadd.f32 %v1435, %v1634
        %v1636 = vpop.f32.mrb[0].mxu0
        %v1637 = vadd.f32 %v1435, %v1636
        %1638 = vmatprep.mubr.bf16.mxu0 0
        %1639 = vmatmul.mubr.bf16.gmra.mrb[0].mxu0 %v351
        %v1640 = vpop.f32.mrb[0].mxu0
        %v1641 = vadd.f32 %v1435, %v1640
        %v1642 = vpop.f32.mrb[0].mxu0
        %v1643 = vadd.f32 %v1435, %v1642
        %v1644 = vpop.f32.mrb[0].mxu0
        %v1645 = vadd.f32 %v1435, %v1644
        %v1646 = vpop.f32.mrb[0].mxu0
        %v1647 = vadd.f32 %v1435, %v1646
        %1648 = vdwg.mxu0
        %1649 = vmatprep.subr.bf16.mxu0 %v1535
        %1650 = vmatpush1.bf16.msra.mxu0 %v1534
        %1651 = vmatprep.subr.bf16.mxu0 %v1539
        %1652 = vmatpush1.bf16.msra.mxu0 %v1538
        %1653 = vmatprep.subr.bf16.mxu0 %v1543
        %1654 = vmatpush1.bf16.msra.mxu0 %v1542
        %1655 = vmatprep.subr.bf16.mxu0 %v1547
        %1656 = vmatpush1.bf16.msra.mxu0 %v1546
        %1657 = vmatprep.subr.bf16.mxu0 %v1551
        %1658 = vmatpush1.bf16.msra.mxu0 %v1550
        %1659 = vmatprep.subr.bf16.mxu0 %v1555
        %1660 = vmatpush1.bf16.msra.mxu0 %v1554
        %1661 = vmatprep.subr.bf16.mxu0 %v1559
        %1662 = vmatpush1.bf16.msra.mxu0 %v1558
        %1663 = vmatprep.subr.bf16.mxu0 %v1563
        %1664 = vmatpush1.bf16.msra.mxu0 %v1562
        %1665 = vmatprep.subr.bf16.mxu0 0
        %1666 = vmatpush1.bf16.msra.mxu0 0
        %1667 = vmatprep.subr.bf16.mxu0 0
        %1668 = vmatpush1.bf16.msra.mxu0 0
        %1669 = vmatprep.subr.bf16.mxu0 0
        %1670 = vmatpush1.bf16.msra.mxu0 0
        %1671 = vmatprep.subr.bf16.mxu0 0
        %1672 = vmatpush1.bf16.msra.mxu0 0
        %1673 = vmatprep.subr.bf16.mxu0 0
        %1674 = vmatpush1.bf16.msra.mxu0 0
        %1675 = vmatprep.subr.bf16.mxu0 0
        %1676 = vmatpush1.bf16.msra.mxu0 0
        %1677 = vmatprep.subr.bf16.mxu0 0
        %1678 = vmatpush1.bf16.msra.mxu0 0
        %1679 = vmatprep.subr.bf16.mxu0 0
        %1680 = vmatpush1.bf16.msra.mxu0 0
        %1681 = vmatprep.mubr.bf16.mxu0 0
        %1682 = vmatmul.mubr.bf16.gmra.mrb[0].mxu0 %v350
        %v1683 = vpop.f32.mrb[0].mxu0
        %v1684 = vadd.f32 %v1435, %v1683
        %v1685 = vpop.f32.mrb[0].mxu0
        %v1686 = vadd.f32 %v1435, %v1685
        %v1687 = vpop.f32.mrb[0].mxu0
        %v1688 = vadd.f32 %v1435, %v1687
        %v1689 = vpop.f32.mrb[0].mxu0
        %v1690 = vadd.f32 %v1435, %v1689
        %1691 = vmatprep.mubr.bf16.mxu0 0
        %1692 = vmatmul.mubr.bf16.gmra.mrb[0].mxu0 %v351
        %v1693 = vpop.f32.mrb[0].mxu0
        %v1694 = vadd.f32 %v1435, %v1693
        %v1695 = vpop.f32.mrb[0].mxu0
        %v1696 = vadd.f32 %v1435, %v1695
        %v1697 = vpop.f32.mrb[0].mxu0
        %v1698 = vadd.f32 %v1435, %v1697
        %v1699 = vpop.f32.mrb[0].mxu0
        %v1700 = vadd.f32 %v1435, %v1699
        %1701 = vdwg.mxu0
        %v1702 = vmax.f32 %v1631, 0.0
        %v1703 = vmax.f32 %v1633, 0.0
        %v1704 = vmax.f32 %v1684, 0.0
        %v1705 = vmax.f32 %v1686, 0.0
        %v1706 = vmax.f32 %v1635, 0.0
        %v1707 = vmax.f32 %v1637, 0.0
        %v1708 = vmax.f32 %v1688, 0.0
        %v1709 = vmax.f32 %v1690, 0.0
        %v1710 = vmax.f32 %v1641, 0.0
        %v1711 = vmax.f32 %v1643, 0.0
        %v1712 = vmax.f32 %v1694, 0.0
        %v1713 = vmax.f32 %v1696, 0.0
        %v1714 = vmax.f32 %v1645, 0.0
        %v1715 = vmax.f32 %v1647, 0.0
        %v1716 = vmax.f32 %v1698, 0.0
        %v1717 = vmax.f32 %v1700, 0.0
        %v1718 = vmin.f32 %v1702, 6.0
        %v1719 = vmin.f32 %v1703, 6.0
        %v1720 = vmin.f32 %v1704, 6.0
        %v1721 = vmin.f32 %v1705, 6.0
        %v1722 = vmin.f32 %v1706, 6.0
        %v1723 = vmin.f32 %v1707, 6.0
        %v1724 = vmin.f32 %v1708, 6.0
        %v1725 = vmin.f32 %v1709, 6.0
        %v1726 = vmin.f32 %v1710, 6.0
        %v1727 = vmin.f32 %v1711, 6.0
        %v1728 = vmin.f32 %v1712, 6.0
        %v1729 = vmin.f32 %v1713, 6.0
        %v1730 = vmin.f32 %v1714, 6.0
        %v1731 = vmin.f32 %v1715, 6.0
        %v1732 = vmin.f32 %v1716, 6.0
        %v1733 = vmin.f32 %v1717, 6.0
        %v1734 = vstv %s1433
        %v1735 = vmul.f32 %v1734, %v1718
        %v1736 = vmul.f32 %v1734, %v1719
        %v1737 = vmul.f32 %v1734, %v1720
        %v1738 = vmul.f32 %v1734, %v1721
        %v1739 = vmul.f32 %v1734, %v1722
        %v1740 = vmul.f32 %v1734, %v1723
        %v1741 = vmul.f32 %v1734, %v1724
        %v1742 = vmul.f32 %v1734, %v1725
        %v1743 = vmul.f32 %v1734, %v1726
        %v1744 = vmul.f32 %v1734, %v1727
        %v1745 = vmul.f32 %v1734, %v1728
        %v1746 = vmul.f32 %v1734, %v1729
        %v1747 = vmul.f32 %v1734, %v1730
        %v1748 = vmul.f32 %v1734, %v1731
        %v1749 = vmul.f32 %v1734, %v1732
        %v1750 = vmul.f32 %v1734, %v1733
        %v1751 = vadd.f32 %v1385, %v1735
        %v1752 = vadd.f32 %v1386, %v1736
        %v1753 = vadd.f32 %v1387, %v1737
        %v1754 = vadd.f32 %v1388, %v1738
        %v1755 = vadd.f32 %v1389, %v1739
        %v1756 = vadd.f32 %v1390, %v1740
        %v1757 = vadd.f32 %v1391, %v1741
        %v1758 = vadd.f32 %v1392, %v1742
        %v1759 = vadd.f32 %v1393, %v1743
        %v1760 = vadd.f32 %v1394, %v1744
        %v1761 = vadd.f32 %v1395, %v1745
        %v1762 = vadd.f32 %v1396, %v1746
        %v1763 = vadd.f32 %v1397, %v1747
        %v1764 = vadd.f32 %v1398, %v1748
        %v1765 = vadd.f32 %v1399, %v1749
        %v1766 = vadd.f32 %v1400, %v1750
        %s1767 = sld [smem:[#allocation2]]
        %v1768 = vstv %s1767
        %v1769 = vadd.f32 %v1751, %v1768
        %v1770 = vadd.f32 %v1752, %v1768
        %v1771 = vadd.f32 %v1753, %v1768
        %v1772 = vadd.f32 %v1754, %v1768
        %v1773 = vadd.f32 %v1755, %v1768
        %v1774 = vadd.f32 %v1756, %v1768
        %v1775 = vadd.f32 %v1757, %v1768
        %v1776 = vadd.f32 %v1758, %v1768
        %v1777 = vadd.f32 %v1759, %v1768
        %v1778 = vadd.f32 %v1760, %v1768
        %v1779 = vadd.f32 %v1761, %v1768
        %v1780 = vadd.f32 %v1762, %v1768
        %v1781 = vadd.f32 %v1763, %v1768
        %v1782 = vadd.f32 %v1764, %v1768
        %v1783 = vadd.f32 %v1765, %v1768
        %v1784 = vadd.f32 %v1766, %v1768
        %v1785 = vpack.c.bf16 %v1773, %v1769
        %v1786 = vpack.c.bf16 %v1774, %v1770
        %v1787 = vpack.c.bf16 %v1775, %v1771
        %v1788 = vpack.c.bf16 %v1776, %v1772
        %v1789 = vpack.c.bf16 %v1781, %v1777
        %v1790 = vpack.c.bf16 %v1782, %v1778
        %v1791 = vpack.c.bf16 %v1783, %v1779
        %v1792 = vpack.c.bf16 %v1784, %v1780
        %v1801 = vunpack.c.l.b16 %v1785
        %v1802 = vunpack.c.l.b16 %v1786
        %v1803 = vunpack.c.l.b16 %v1787
        %v1804 = vunpack.c.l.b16 %v1788
        %v1805 = vunpack.c.h.b16 %v1785
        %v1806 = vunpack.c.h.b16 %v1786
        %v1807 = vunpack.c.h.b16 %v1787
        %v1808 = vunpack.c.h.b16 %v1788
        %v1809 = vunpack.c.l.b16 %v1789
        %v1810 = vunpack.c.l.b16 %v1790
        %v1811 = vunpack.c.l.b16 %v1791
        %v1812 = vunpack.c.l.b16 %v1792
        %v1813 = vunpack.c.h.b16 %v1789
        %v1814 = vunpack.c.h.b16 %v1790
        %v1815 = vunpack.c.h.b16 %v1791
        %v1816 = vunpack.c.h.b16 %v1792
        %v1817 = vpack.c.b16 %v1802, %v1801
        %v1818 = vpack.c.b16 %v1804, %v1803
        %v1819 = vpack.c.b16 %v1806, %v1805
        %v1820 = vpack.c.b16 %v1808, %v1807
        %v1821 = vpack.c.b16 %v1810, %v1809
        %v1822 = vpack.c.b16 %v1812, %v1811
        %v1823 = vpack.c.b16 %v1814, %v1813
        %v1824 = vpack.c.b16 %v1816, %v1815
        %1833 = vst [vmem:[%s292] sm:$0xff] %v1817
        %1834 = vst [vmem:[%s292 + $0x8] sm:$0xff] %v1818
        %1835 = vst [vmem:[%s292 + $0x10] sm:$0xff] %v1819
        %1836 = vst [vmem:[%s292 + $0x18] sm:$0xff] %v1820
        %1837 = vst [vmem:[%s292 + $0x20] sm:$0xff] %v1821
        %1838 = vst [vmem:[%s292 + $0x28] sm:$0xff] %v1822
        %1839 = vst [vmem:[%s292 + $0x30] sm:$0xff] %v1823
        %1840 = vst [vmem:[%s292 + $0x38] sm:$0xff] %v1824
        %s1841 = sand.u32 %s159, 1
        %s1842 = sand.u32 %s159, 1
        %s1843 = smul.addr %s1842, 64
        %s1844 = scalar_lea.vmem [#allocation9], %s1843
        // Predicated region
        $region53: #{smim_decoder_forward.1} parent=39 // pred_check
          %p1845 = pneg %p169
        $region54: #{smim_decoder_forward.1} parent=39 // pred_check_branch
          %1847 = sbr.rel (%p1845) target = $region56
        $region55: #{smim_decoder_forward.1} parent=39 // pred_region
          %s1848 = smul.u32 4, %s27
          %s1849 = smul.u32 4, %s26
          %s1850 = smul.addr %s1848, 32
          %s1851 = sadd.s32 %s1849, %s1850
          %s1852 = smul.addr %s1851, 4
          %s1853 = scalar_lea.vmem %s5, %s1852
          // Predicated region
          $region57: #{smim_decoder_forward.1} parent=55 // pred_check
            _
          $region58: #{smim_decoder_forward.1} parent=55 // pred_check_branch
            %1855 = sbr.rel (0) target = $region60
          $region59: #{smim_decoder_forward.1} parent=55 // pred_region
            // Predicated region
            $region61: #{smim_decoder_forward.1} parent=59 // pred_check
              _
            $region62: #{smim_decoder_forward.1} parent=59 // pred_check_branch
              %1857 = sbr.rel (0) target = $region64
            $region63: #{smim_decoder_forward.1} parent=59 // pred_region
              loop: start=0, step=1, limit=1
              $region65: #{smim_decoder_forward.1} parent=63 // loop_pre_header
                _
              $region66: #{smim_decoder_forward.1} parent=63 // loop_header
                %s1859 = sphi 0, %s1863
                %p1860 = scmp.ge.s32.totalorder %s1859, 1
                %s1864 = sphi %s1844, %s1844
                %s1865 = sphi %s1853, %s1853
              $region67: #{smim_decoder_forward.1} parent=63 // loop_header_branch
                %1862 = sbr.rel (%p1860) target = $region71
              $region68: #{smim_decoder_forward.1} parent=63 // loop_body
                %v1866 = vld [vmem:[%s1864] sm:$0xff]
                %1867 = vst [vmem:[%s1865] sm:$0xff] %v1866
                %v1868 = vld [vmem:[%s1864 + $0x8] sm:$0xff]
                %1869 = vst [vmem:[%s1865 + $0x8] sm:$0xff] %v1868
                %v1870 = vld [vmem:[%s1864 + $0x10] sm:$0xff]
                %1871 = vst [vmem:[%s1865 + $0x80] sm:$0xff] %v1870
                %v1872 = vld [vmem:[%s1864 + $0x18] sm:$0xff]
                %1873 = vst [vmem:[%s1865 + $0x88] sm:$0xff] %v1872
                %v1874 = vld [vmem:[%s1864 + $0x20] sm:$0xff]
                %1875 = vst [vmem:[%s1865 + $0x100] sm:$0xff] %v1874
                %v1876 = vld [vmem:[%s1864 + $0x28] sm:$0xff]
                %1877 = vst [vmem:[%s1865 + $0x108] sm:$0xff] %v1876
                %v1878 = vld [vmem:[%s1864 + $0x30] sm:$0xff]
                %1879 = vst [vmem:[%s1865 + $0x180] sm:$0xff] %v1878
                %v1880 = vld [vmem:[%s1864 + $0x38] sm:$0xff]
                %1881 = vst [vmem:[%s1865 + $0x188] sm:$0xff] %v1880
              $region69: #{smim_decoder_forward.1} parent=63 // loop_footer
                %s1863 = sadd.s32 1, %s1859
              $region70: #{smim_decoder_forward.1} parent=63 // loop_footer_branch
                %1858 = sbr.rel target = $region66
              $region71: #{smim_decoder_forward.1} parent=63 // loop_exit
                _
            $region64: #{smim_decoder_forward.1} parent=59 // pred_fallthru
              _
            // Predicated region
            $region72: #{smim_decoder_forward.1} parent=59 // pred_check
              _
            $region73: #{smim_decoder_forward.1} parent=59 // pred_check_branch
              %1883 = sbr.rel target = $region75
            $region74: #{smim_decoder_forward.1} parent=59 // pred_region
              _
            $region75: #{smim_decoder_forward.1} parent=59 // pred_fallthru
              _
          $region60: #{smim_decoder_forward.1} parent=55 // pred_fallthru
            _
          %1884 = vnop
        $region56: #{smim_decoder_forward.1} parent=39 // pred_fallthru
          _
      $region40: #{smim_decoder_forward.1} parent=5 // pred_fallthru
        _
      %p1885 = scmp.le.s32.totalorder 2, %s17
      // Predicated region
      $region76: #{smim_decoder_forward.1} parent=5 // pred_check
        %p1886 = pneg %p1885
      $region77: #{smim_decoder_forward.1} parent=5 // pred_check_branch
        %1888 = sbr.rel (%p1886) target = $region79
      $region78: #{smim_decoder_forward.1} parent=5 // pred_region
        %s1889 = ssub.s32 %s17, 2
        // Predicated region
        $region80: #{smim_decoder_forward.1} parent=78 // pred_check
          %p1890 = pneg %p175
        $region81: #{smim_decoder_forward.1} parent=78 // pred_check_branch
          %1892 = sbr.rel (%p1890) target = $region83
        $region82: #{smim_decoder_forward.1} parent=78 // pred_region
          %s1893 = sand.u32 %s160, 1
          %s1894 = sand.u32 %s160, 1
          %s1895 = smul.addr %s1894, 64
          %s1896 = scalar_lea.vmem [#allocation9], %s1895
        $region83: #{smim_decoder_forward.1} parent=78 // pred_fallthru
          _
      $region79: #{smim_decoder_forward.1} parent=5 // pred_fallthru
        _
    $region6: #{smim_decoder_forward.1} parent=1 // loop_footer
      %s21 = sadd.s32 1, %s17
    $region7: #{smim_decoder_forward.1} parent=1 // loop_footer_branch
      %16 = sbr.rel target = $region3
    $region8: #{smim_decoder_forward.1} parent=1 // loop_exit
      _
    %1897 = vsyncpa [#allocation4], 1
    %s1898 = scalar_lea.sflag [#allocation4], 1
    %1899 = vsyncpa %s1898, 1
    %1900 = vsyncpa [#allocation5], 1
    %s1901 = scalar_lea.sflag [#allocation5], 1
    %1902 = vsyncpa %s1901, 1
    %1903 = vsyncpa [#allocation8], 1

</llo_original>
